<compile_context>
chip_gen: v7x
topology: tpu7x:2x2x1
jax: 0.10.0
libtpu: 0.0.40
codegen_flags: <defaults>
</compile_context>

<pallas_src>
import math
import functools

import jax
import jax.numpy as jnp
from jax.experimental import pallas as pl
from jax.experimental.pallas import tpu as pltpu


# ----------------------------------------------------------------------------
# Kernels
# ----------------------------------------------------------------------------
def _attention_kernel_native(q_ref, k_ref, v_ref, m_ref, alpha_ref, attn_ref,
                             *, scale):
    """Batch-merged step; values arrive in native (T, Bb, V) layout.

    Block shapes:
      q_ref     (Bb, 1, Dq)   k_ref (Bb, Dq, T)   v_ref (T, Bb, V)
      m_ref     (Bb, T) int32
      alpha_ref (Bb, T)       attn_ref (Bb, V)
    """
    q = q_ref[...]
    k = k_ref[...]
    # scores: batched (1 x Dq) @ (Dq x T) on the MXU -> (Bb, 1, T)
    e3 = jnp.einsum("bqd,bdt->bqt", q, k, preferred_element_type=jnp.float32)
    # reduce over the unit axis == squeeze to (Bb, T); reductions have the most
    # robust TPU lowering for this relayout.
    e = jnp.sum(e3, axis=1)

    mask = m_ref[...]
    # torch: e.masked_fill_(mask, 0) happens BEFORE the scale multiply.
    e = jnp.where(mask != 0, 0.0, e)
    e = e * scale

    # softmax over T
    e_max = jnp.max(e, axis=-1, keepdims=True)
    p = jnp.exp(e - e_max)
    denom = jnp.sum(p, axis=-1, keepdims=True)
    alpha = p * pl.reciprocal(denom, approx=True)          # EUP reciprocal
    alpha_ref[...] = alpha.astype(alpha_ref.dtype)

    # attn[b, v] = sum_t alpha[b, t] * values[t, b, v]
    # VPU multiply-adds over lane-broadcast alpha columns; values stay in their
    # native layout, so no transpose (HBM or VMEM) and no M=1 MXU matvec.
    # T is a static block dim; the loop unrolls (fine for small/moderate T).
    n_t = v_ref.shape[0]
    acc = jnp.zeros(attn_ref.shape, jnp.float32)
    for t in range(n_t):
        acc = acc + alpha[:, t:t + 1] * v_ref[t]
    attn_ref[...] = acc.astype(attn_ref.dtype)


def _attention_kernel_fallback(q_ref, k_ref, v_ref, m_ref, alpha_ref, attn_ref,
                               *, scale):
    """Conservative path: values pre-transposed to (Bb, T, V); 3-D einsums only."""
    e = jnp.einsum("bqd,bdt->bqt", q_ref[...], k_ref[...],
                   preferred_element_type=jnp.float32)      # (Bb, 1, T)
    mask = m_ref[...]                                        # (Bb, 1, T)
    e = jnp.where(mask != 0, 0.0, e) * scale
    e_max = jnp.max(e, axis=-1, keepdims=True)
    p = jnp.exp(e - e_max)
    denom = jnp.sum(p, axis=-1, keepdims=True)
    alpha = p * pl.reciprocal(denom, approx=True)            # (Bb, 1, T)
    alpha_ref[...] = alpha.astype(alpha_ref.dtype)
    attn_ref[...] = jnp.einsum("bqt,btv->bqv", alpha, v_ref[...],
                               preferred_element_type=jnp.float32
                               ).astype(attn_ref.dtype)


# ----------------------------------------------------------------------------
# Block sizing
# ----------------------------------------------------------------------------
def _per_batch_vmem_bytes(Dq, D, T, V):
    lane = lambda n: -(-n // 128) * 128
    sub = lambda n: -(-n // 8) * 8
    b = 4 * (8 * lane(Dq)             # q  (1, Dq) tile padded to 8 sublanes
             + sub(D) * lane(T)       # k  (D, T) tile
             + sub(T) * lane(V)       # values, per-batch share
             + 3 * lane(max(T, V)))   # mask + alpha + attn rows
    return 2 * b                      # double-buffered by the pipeline


def _pick_block_b(bs, per_b_bytes, vmem_budget):
    cap = max(1, vmem_budget // max(per_b_bytes, 1))
    if bs <= cap:
        return bs                     # whole batch resident: single grid step
    best = None
    d = 8
    while d <= min(bs, cap):
        if bs % d == 0:               # must divide bs and be a multiple of 8
            best = d
        d += 8
    # TODO(synk): ragged (non-divisor) batch blocks are not handled; fall back
    # to the whole batch if no multiple-of-8 divisor fits the budget.
    return best if best is not None else bs


# ----------------------------------------------------------------------------
# Forward
# ----------------------------------------------------------------------------
def _attention_forward_impl(query, keys, values, mask, *, native_values,
                            block_b=None, vmem_budget=8 * 1024 * 1024):
    T, bs, D = keys.shape
    V = values.shape[-1]
    Dq = query.shape[-1]
    Dk = keys.size // (bs * T)            # middle dim of keys.view(bs, -1, T)
    scale = 1.0 / math.sqrt(Dq)

    # Wrapper glue replicating the exact torch view semantics.  All of these
    # are metadata-only in XLA (no HBM copies).
    q3 = query[:, None, :]                      # (bs, 1, Dq)
    k3 = jnp.reshape(keys, (bs, Dk, T))         # raw reshape == torch .view
    if mask is None:
        m2 = jnp.zeros((bs, T), dtype=jnp.int32)
    else:
        m2 = mask.astype(jnp.int32)             # (bs, T)

    if block_b is None:
        block_b = _pick_block_b(bs, _per_batch_vmem_bytes(Dq, Dk, T, V),
                                vmem_budget)
    bb = block_b
    grid = (pl.cdiv(bs, bb),)
    cparams = pltpu.CompilerParams(dimension_semantics=("parallel",))

    if native_values:
        kernel = functools.partial(_attention_kernel_native, scale=scale)
        alpha2, attn2 = pl.pallas_call(
            kernel,
            out_shape=(jax.ShapeDtypeStruct((bs, T), jnp.float32),
                       jax.ShapeDtypeStruct((bs, V), jnp.float32)),
            grid_spec=pltpu.PrefetchScalarGridSpec(
                num_scalar_prefetch=0,
                grid=grid,
                in_specs=[
                    pl.BlockSpec((bb, 1, Dq), lambda b: (b, 0, 0)),
                    pl.BlockSpec((bb, Dk, T), lambda b: (b, 0, 0)),
                    pl.BlockSpec((T, bb, V), lambda b: (0, b, 0)),
                    pl.BlockSpec((bb, T), lambda b: (b, 0)),
                ],
                out_specs=(
                    pl.BlockSpec((bb, T), lambda b: (b, 0)),
                    pl.BlockSpec((bb, V), lambda b: (b, 0)),
                ),
            ),
            compiler_params=cparams,
        )(q3, k3, values, m2)
        alpha = alpha2[:, None, :]              # (bs, 1, T) -- free reshape
        attn = jnp.squeeze(attn2)               # matches torch .squeeze()
        return alpha, attn

    # Fallback: values transposed batch-major in the wrapper (extra HBM pass).
    v3 = jnp.transpose(values, (1, 0, 2))        # (bs, T, V)
    m3 = m2[:, None, :]                          # (bs, 1, T)
    kernel = functools.partial(_attention_kernel_fallback, scale=scale)
    alpha, attn3 = pl.pallas_call(
        kernel,
        out_shape=(jax.ShapeDtypeStruct((bs, 1, T), jnp.float32),
                   jax.ShapeDtypeStruct((bs, 1, V), jnp.float32)),
        grid_spec=pltpu.PrefetchScalarGridSpec(
            num_scalar_prefetch=0,
            grid=grid,
            in_specs=[
                pl.BlockSpec((bb, 1, Dq), lambda b: (b, 0, 0)),
                pl.BlockSpec((bb, Dk, T), lambda b: (b, 0, 0)),
                pl.BlockSpec((bb, T, V), lambda b: (b, 0, 0)),
                pl.BlockSpec((bb, 1, T), lambda b: (b, 0, 0)),
            ],
            out_specs=(
                pl.BlockSpec((bb, 1, T), lambda b: (b, 0, 0)),
                pl.BlockSpec((bb, 1, V), lambda b: (b, 0, 0)),
            ),
        ),
        compiler_params=cparams,
    )(q3, k3, v3, m3)
    attn = jnp.squeeze(attn3)
    return alpha, attn


def attention_forward(query, keys, values, mask=None, *, block_b=None):
    """Mirrors Attention.forward: returns (alpha, attn)."""
    try:
        out = _attention_forward_impl(query, keys, values, mask,
                                      native_values=True, block_b=block_b)
        jax.block_until_ready(out)       # surface any lowering issue right here
        return out
    except Exception:
        # Layout-sensitive native-values kernel failed to lower on this
        # toolchain: use the fully conservative (doc-proven) path instead.
        return _attention_forward_impl(query, keys, values, mask,
                                       native_values=False, block_b=block_b)


# ----------------------------------------------------------------------------
# Reference + self-test
# ----------------------------------------------------------------------------
def _reference(query, keys, values, mask):
    """Pure-JAX replica of the torch forward, for correctness check."""
    T, bs, _ = keys.shape
    scale = 1.0 / math.sqrt(query.shape[-1])
    q = query[:, None, :]
    kk = jnp.reshape(keys, (bs, -1, T))
    e = jnp.einsum("bik,bkt->bit", q, kk)
    if mask is not None:
        e = jnp.where(mask[:, None, :], 0.0, e)
    a = jax.nn.softmax(e * scale, axis=-1)
    v = jnp.transpose(values, (1, 0, 2))
    at = jnp.squeeze(jnp.einsum("bit,btv->biv", a, v))
    return a, at


if __name__ == "__main__":
    # The module has no trainable parameters; only scale = 1/sqrt(query_dim).
    T, bs, D, V = 8, 4, 32, 32
    key = jax.random.PRNGKey(0)
    k1, k2, k3, k4 = jax.random.split(key, 4)
    query = jax.random.normal(k1, (bs, D), dtype=jnp.float32)
    keys = jax.random.normal(k2, (T, bs, D), dtype=jnp.float32)
    values = jax.random.normal(k3, (T, bs, V), dtype=jnp.float32)
    mask = jax.random.bernoulli(k4, 0.3, (bs, T))

    alpha, attn = attention_forward(query, keys, values, mask)
    jax.block_until_ready((alpha, attn))

    a_ref, at_ref = _reference(query, keys, values, mask)
    assert alpha.shape == (bs, 1, T) and attn.shape == (bs, V)
    # approx reciprocal in the kernel -> slightly relaxed tolerance
    assert jnp.allclose(alpha, a_ref, atol=2e-3, rtol=2e-3), "alpha mismatch"
    assert jnp.allclose(attn, at_ref, atol=2e-3, rtol=2e-3), "attn mismatch"

    print("KERNEL_OK")
</pallas_src>

<mosaic_0001>
module attributes {stable_mosaic.version = 11 : i64} {
  func.func @_attention_kernel_native(%arg0: i32, %arg1: memref<4x1x32xf32, #tpu.memory_space<vmem>>, %arg2: memref<4x32x8xf32, #tpu.memory_space<vmem>>, %arg3: memref<8x4x32xf32, #tpu.memory_space<vmem>>, %arg4: memref<4x8xi32, #tpu.memory_space<vmem>>, %arg5: memref<4x8xf32, #tpu.memory_space<vmem>>, %arg6: memref<4x32xf32, #tpu.memory_space<vmem>>) attributes {dimension_semantics = [#tpu.dimension_semantics<parallel>], iteration_bounds = array<i64: 1>, scalar_prefetch = 0 : i64, scratch_operands = 0 : i64, tpu.core_type = #tpu.core_type<tc>, window_params = [{transform_indices = @transform_0, window_bounds = array<i64: 4, 1, 32>}, {transform_indices = @transform_1, window_bounds = array<i64: 4, 32, 8>}, {transform_indices = @transform_2, window_bounds = array<i64: 8, 4, 32>}, {transform_indices = @transform_3, window_bounds = array<i64: 4, 8>}, {transform_indices = @transform_4, window_bounds = array<i64: 4, 8>}, {transform_indices = @transform_5, window_bounds = array<i64: 4, 32>}]} {
    %c0 = arith.constant 0 : index
    %c0_0 = arith.constant 0 : index
    %c0_1 = arith.constant 0 : index
    %0 = vector.load %arg1[%c0, %c0_0, %c0_1] : memref<4x1x32xf32, #tpu.memory_space<vmem>>, vector<4x1x32xf32>
    %c0_2 = arith.constant 0 : index
    %c0_3 = arith.constant 0 : index
    %c0_4 = arith.constant 0 : index
    %1 = vector.load %arg2[%c0_2, %c0_3, %c0_4] : memref<4x32x8xf32, #tpu.memory_space<vmem>>, vector<4x32x8xf32>
    "tpu.trace_start"() <{level = 10 : i32, message = "bqd,bdt->bqt"}> : () -> ()
    %cst = arith.constant dense<0.000000e+00> : vector<4x1x8xf32>
    %2 = tpu.matmul %0, %1, %cst {dimension_numbers = #tpu.dot_dimension_numbers<[2], [1], [1], [2], [0, 0, 0, 1, 1, 2], [0], [0]>} : vector<4x1x32xf32>, vector<4x32x8xf32>, vector<4x1x8xf32> -> vector<4x1x8xf32>
    "tpu.trace_stop"() : () -> ()
    %cst_5 = arith.constant dense<0.000000e+00> : vector<4x8xf32>
    %3 = vector.multi_reduction <add>, %2, %cst_5 [1] : vector<4x1x8xf32> to vector<4x8xf32>
    %c0_6 = arith.constant 0 : index
    %c0_7 = arith.constant 0 : index
    %4 = vector.load %arg4[%c0_6, %c0_7] : memref<4x8xi32, #tpu.memory_space<vmem>>, vector<4x8xi32>
    %c0_i32 = arith.constant 0 : i32
    %5 = vector.broadcast %c0_i32 : i32 to vector<4x8xi32>
    %6 = arith.cmpi ne, %4, %5 : vector<4x8xi32>
    %cst_8 = arith.constant 0.000000e+00 : f32
    %7 = vector.broadcast %cst_8 : f32 to vector<4x8xf32>
    %8 = arith.select %6, %7, %3 : vector<4x8xi1>, vector<4x8xf32>
    %cst_9 = arith.constant 0.176776692 : f32
    %9 = vector.broadcast %cst_9 : f32 to vector<4x8xf32>
    %10 = arith.mulf %8, %9 : vector<4x8xf32>
    %cst_10 = arith.constant dense<0xFF800000> : vector<4xf32>
    %11 = vector.multi_reduction <maximumf>, %10, %cst_10 [1] : vector<4x8xf32> to vector<4xf32>
    %12 = vector.shape_cast %11 : vector<4xf32> to vector<4x1xf32>
    %13 = vector.broadcast %12 : vector<4x1xf32> to vector<4x8xf32>
    %14 = arith.subf %10, %13 : vector<4x8xf32>
    %15 = math.exp %14 : vector<4x8xf32>
    %cst_11 = arith.constant dense<0.000000e+00> : vector<4xf32>
    %16 = vector.multi_reduction <add>, %15, %cst_11 [1] : vector<4x8xf32> to vector<4xf32>
    %17 = vector.shape_cast %16 : vector<4xf32> to vector<4x1xf32>
    %18 = tpu.reciprocal %17 {approx = true} : vector<4x1xf32> -> vector<4x1xf32>
    %19 = vector.broadcast %18 : vector<4x1xf32> to vector<4x8xf32>
    %20 = arith.mulf %15, %19 : vector<4x8xf32>
    %c0_12 = arith.constant 0 : index
    %c0_13 = arith.constant 0 : index
    %21 = vector.load %arg5[%c0_12, %c0_13] : memref<4x8xf32, #tpu.memory_space<vmem>>, vector<4x8xf32>
    tpu.vector_store %arg5[%c0_12, %c0_13], %20 {strides = array<i32>} : memref<4x8xf32, #tpu.memory_space<vmem>>, vector<4x8xf32>,
    %cst_14 = arith.constant 0.000000e+00 : f32
    %22 = vector.broadcast %cst_14 : f32 to vector<4x32xf32>
    %23 = vector.extract_strided_slice %20 {offsets = [0, 0], sizes = [4, 1], strides = [1, 1]} : vector<4x8xf32> to vector<4x1xf32>
    %c0_15 = arith.constant 0 : index
    %c0_16 = arith.constant 0 : index
    %c0_17 = arith.constant 0 : index
    %24 = vector.load %arg3[%c0_15, %c0_16, %c0_17] : memref<8x4x32xf32, #tpu.memory_space<vmem>>, vector<1x4x32xf32>
    %25 = vector.shape_cast %24 : vector<1x4x32xf32> to vector<4x32xf32>
    %26 = vector.broadcast %23 : vector<4x1xf32> to vector<4x32xf32>
    %27 = arith.mulf %26, %25 : vector<4x32xf32>
    %28 = arith.addf %22, %27 : vector<4x32xf32>
    %29 = vector.extract_strided_slice %20 {offsets = [0, 1], sizes = [4, 1], strides = [1, 1]} : vector<4x8xf32> to vector<4x1xf32>
    %c1 = arith.constant 1 : index
    %c0_18 = arith.constant 0 : index
    %c0_19 = arith.constant 0 : index
    %30 = vector.load %arg3[%c1, %c0_18, %c0_19] : memref<8x4x32xf32, #tpu.memory_space<vmem>>, vector<1x4x32xf32>
    %31 = vector.shape_cast %30 : vector<1x4x32xf32> to vector<4x32xf32>
    %32 = vector.broadcast %29 : vector<4x1xf32> to vector<4x32xf32>
    %33 = arith.mulf %32, %31 : vector<4x32xf32>
    %34 = arith.addf %28, %33 : vector<4x32xf32>
    %35 = vector.extract_strided_slice %20 {offsets = [0, 2], sizes = [4, 1], strides = [1, 1]} : vector<4x8xf32> to vector<4x1xf32>
    %c2 = arith.constant 2 : index
    %c0_20 = arith.constant 0 : index
    %c0_21 = arith.constant 0 : index
    %36 = vector.load %arg3[%c2, %c0_20, %c0_21] : memref<8x4x32xf32, #tpu.memory_space<vmem>>, vector<1x4x32xf32>
    %37 = vector.shape_cast %36 : vector<1x4x32xf32> to vector<4x32xf32>
    %38 = vector.broadcast %35 : vector<4x1xf32> to vector<4x32xf32>
    %39 = arith.mulf %38, %37 : vector<4x32xf32>
    %40 = arith.addf %34, %39 : vector<4x32xf32>
    %41 = vector.extract_strided_slice %20 {offsets = [0, 3], sizes = [4, 1], strides = [1, 1]} : vector<4x8xf32> to vector<4x1xf32>
    %c3 = arith.constant 3 : index
    %c0_22 = arith.constant 0 : index
    %c0_23 = arith.constant 0 : index
    %42 = vector.load %arg3[%c3, %c0_22, %c0_23] : memref<8x4x32xf32, #tpu.memory_space<vmem>>, vector<1x4x32xf32>
    %43 = vector.shape_cast %42 : vector<1x4x32xf32> to vector<4x32xf32>
    %44 = vector.broadcast %41 : vector<4x1xf32> to vector<4x32xf32>
    %45 = arith.mulf %44, %43 : vector<4x32xf32>
    %46 = arith.addf %40, %45 : vector<4x32xf32>
    %47 = vector.extract_strided_slice %20 {offsets = [0, 4], sizes = [4, 1], strides = [1, 1]} : vector<4x8xf32> to vector<4x1xf32>
    %c4 = arith.constant 4 : index
    %c0_24 = arith.constant 0 : index
    %c0_25 = arith.constant 0 : index
    %48 = vector.load %arg3[%c4, %c0_24, %c0_25] : memref<8x4x32xf32, #tpu.memory_space<vmem>>, vector<1x4x32xf32>
    %49 = vector.shape_cast %48 : vector<1x4x32xf32> to vector<4x32xf32>
    %50 = vector.broadcast %47 : vector<4x1xf32> to vector<4x32xf32>
    %51 = arith.mulf %50, %49 : vector<4x32xf32>
    %52 = arith.addf %46, %51 : vector<4x32xf32>
    %53 = vector.extract_strided_slice %20 {offsets = [0, 5], sizes = [4, 1], strides = [1, 1]} : vector<4x8xf32> to vector<4x1xf32>
    %c5 = arith.constant 5 : index
    %c0_26 = arith.constant 0 : index
    %c0_27 = arith.constant 0 : index
    %54 = vector.load %arg3[%c5, %c0_26, %c0_27] : memref<8x4x32xf32, #tpu.memory_space<vmem>>, vector<1x4x32xf32>
    %55 = vector.shape_cast %54 : vector<1x4x32xf32> to vector<4x32xf32>
    %56 = vector.broadcast %53 : vector<4x1xf32> to vector<4x32xf32>
    %57 = arith.mulf %56, %55 : vector<4x32xf32>
    %58 = arith.addf %52, %57 : vector<4x32xf32>
    %59 = vector.extract_strided_slice %20 {offsets = [0, 6], sizes = [4, 1], strides = [1, 1]} : vector<4x8xf32> to vector<4x1xf32>
    %c6 = arith.constant 6 : index
    %c0_28 = arith.constant 0 : index
    %c0_29 = arith.constant 0 : index
    %60 = vector.load %arg3[%c6, %c0_28, %c0_29] : memref<8x4x32xf32, #tpu.memory_space<vmem>>, vector<1x4x32xf32>
    %61 = vector.shape_cast %60 : vector<1x4x32xf32> to vector<4x32xf32>
    %62 = vector.broadcast %59 : vector<4x1xf32> to vector<4x32xf32>
    %63 = arith.mulf %62, %61 : vector<4x32xf32>
    %64 = arith.addf %58, %63 : vector<4x32xf32>
    %65 = vector.extract_strided_slice %20 {offsets = [0, 7], sizes = [4, 1], strides = [1, 1]} : vector<4x8xf32> to vector<4x1xf32>
    %c7 = arith.constant 7 : index
    %c0_30 = arith.constant 0 : index
    %c0_31 = arith.constant 0 : index
    %66 = vector.load %arg3[%c7, %c0_30, %c0_31] : memref<8x4x32xf32, #tpu.memory_space<vmem>>, vector<1x4x32xf32>
    %67 = vector.shape_cast %66 : vector<1x4x32xf32> to vector<4x32xf32>
    %68 = vector.broadcast %65 : vector<4x1xf32> to vector<4x32xf32>
    %69 = arith.mulf %68, %67 : vector<4x32xf32>
    %70 = arith.addf %64, %69 : vector<4x32xf32>
    %c0_32 = arith.constant 0 : index
    %c0_33 = arith.constant 0 : index
    %71 = vector.load %arg6[%c0_32, %c0_33] : memref<4x32xf32, #tpu.memory_space<vmem>>, vector<4x32xf32>
    tpu.vector_store %arg6[%c0_32, %c0_33], %70 {strides = array<i32>} : memref<4x32xf32, #tpu.memory_space<vmem>>, vector<4x32xf32>,
    return
  }
  func.func @transform_0(%arg0: i32) -> (i32, i32, i32) {
    %c0_i32 = arith.constant 0 : i32
    %c0_i32_0 = arith.constant 0 : i32
    %c0_i32_1 = arith.constant 0 : i32
    return %arg0, %c0_i32, %c0_i32_0 : i32, i32, i32
  }
  func.func @transform_1(%arg0: i32) -> (i32, i32, i32) {
    %c0_i32 = arith.constant 0 : i32
    %c0_i32_0 = arith.constant 0 : i32
    %c0_i32_1 = arith.constant 0 : i32
    return %arg0, %c0_i32, %c0_i32_0 : i32, i32, i32
  }
  func.func @transform_2(%arg0: i32) -> (i32, i32, i32) {
    %c0_i32 = arith.constant 0 : i32
    %c0_i32_0 = arith.constant 0 : i32
    %c0_i32_1 = arith.constant 0 : i32
    return %c0_i32, %arg0, %c0_i32_0 : i32, i32, i32
  }
  func.func @transform_3(%arg0: i32) -> (i32, i32) {
    %c0_i32 = arith.constant 0 : i32
    %c0_i32_0 = arith.constant 0 : i32
    return %arg0, %c0_i32 : i32, i32
  }
  func.func @transform_4(%arg0: i32) -> (i32, i32) {
    %c0_i32 = arith.constant 0 : i32
    %c0_i32_0 = arith.constant 0 : i32
    return %arg0, %c0_i32 : i32, i32
  }
  func.func @transform_5(%arg0: i32) -> (i32, i32) {
    %c0_i32 = arith.constant 0 : i32
    %c0_i32_0 = arith.constant 0 : i32
    return %arg0, %c0_i32 : i32, i32
  }
}

module attributes {stable_mosaic.version = 11 : i64} {
  func.func @_attention_kernel_fallback(%arg0: i32, %arg1: memref<4x1x32xf32, #tpu.memory_space<vmem>>, %arg2: memref<4x32x8xf32, #tpu.memory_space<vmem>>, %arg3: memref<4x8x32xf32, #tpu.memory_space<vmem>>, %arg4: memref<4x1x8xi32, #tpu.memory_space<vmem>>, %arg5: memref<4x1x8xf32, #tpu.memory_space<vmem>>, %arg6: memref<4x1x32xf32, #tpu.memory_space<vmem>>) attributes {dimension_semantics = [#tpu.dimension_semantics<parallel>], iteration_bounds = array<i64: 1>, scalar_prefetch = 0 : i64, scratch_operands = 0 : i64, tpu.core_type = #tpu.core_type<tc>, window_params = [{transform_indices = @transform_0, window_bounds = array<i64: 4, 1, 32>}, {transform_indices = @transform_1, window_bounds = array<i64: 4, 32, 8>}, {transform_indices = @transform_2, window_bounds = array<i64: 4, 8, 32>}, {transform_indices = @transform_3, window_bounds = array<i64: 4, 1, 8>}, {transform_indices = @transform_4, window_bounds = array<i64: 4, 1, 8>}, {transform_indices = @transform_5, window_bounds = array<i64: 4, 1, 32>}]} {
    %c0 = arith.constant 0 : index
    %c0_0 = arith.constant 0 : index
    %c0_1 = arith.constant 0 : index
    %0 = vector.load %arg1[%c0, %c0_0, %c0_1] : memref<4x1x32xf32, #tpu.memory_space<vmem>>, vector<4x1x32xf32>
    %c0_2 = arith.constant 0 : index
    %c0_3 = arith.constant 0 : index
    %c0_4 = arith.constant 0 : index
    %1 = vector.load %arg2[%c0_2, %c0_3, %c0_4] : memref<4x32x8xf32, #tpu.memory_space<vmem>>, vector<4x32x8xf32>
    "tpu.trace_start"() <{level = 10 : i32, message = "bqd,bdt->bqt"}> : () -> ()
    %cst = arith.constant dense<0.000000e+00> : vector<4x1x8xf32>
    %2 = tpu.matmul %0, %1, %cst {dimension_numbers = #tpu.dot_dimension_numbers<[2], [1], [1], [2], [0, 0, 0, 1, 1, 2], [0], [0]>} : vector<4x1x32xf32>, vector<4x32x8xf32>, vector<4x1x8xf32> -> vector<4x1x8xf32>
    "tpu.trace_stop"() : () -> ()
    %c0_5 = arith.constant 0 : index
    %c0_6 = arith.constant 0 : index
    %c0_7 = arith.constant 0 : index
    %3 = vector.load %arg4[%c0_5, %c0_6, %c0_7] : memref<4x1x8xi32, #tpu.memory_space<vmem>>, vector<4x1x8xi32>
    %c0_i32 = arith.constant 0 : i32
    %4 = vector.broadcast %c0_i32 : i32 to vector<4x1x8xi32>
    %5 = arith.cmpi ne, %3, %4 : vector<4x1x8xi32>
    %cst_8 = arith.constant 0.000000e+00 : f32
    %6 = vector.broadcast %cst_8 : f32 to vector<4x1x8xf32>
    %7 = arith.select %5, %6, %2 : vector<4x1x8xi1>, vector<4x1x8xf32>
    %cst_9 = arith.constant 0.176776692 : f32
    %8 = vector.broadcast %cst_9 : f32 to vector<4x1x8xf32>
    %9 = arith.mulf %7, %8 : vector<4x1x8xf32>
    %cst_10 = arith.constant dense<0xFF800000> : vector<4x1xf32>
    %10 = vector.multi_reduction <maximumf>, %9, %cst_10 [2] : vector<4x1x8xf32> to vector<4x1xf32>
    %11 = vector.shape_cast %10 : vector<4x1xf32> to vector<4x1x1xf32>
    %12 = vector.broadcast %11 : vector<4x1x1xf32> to vector<4x1x8xf32>
    %13 = arith.subf %9, %12 : vector<4x1x8xf32>
    %14 = math.exp %13 : vector<4x1x8xf32>
    %cst_11 = arith.constant dense<0.000000e+00> : vector<4x1xf32>
    %15 = vector.multi_reduction <add>, %14, %cst_11 [2] : vector<4x1x8xf32> to vector<4x1xf32>
    %16 = vector.shape_cast %15 : vector<4x1xf32> to vector<4x1x1xf32>
    %17 = tpu.reciprocal %16 {approx = true} : vector<4x1x1xf32> -> vector<4x1x1xf32>
    %18 = vector.broadcast %17 : vector<4x1x1xf32> to vector<4x1x8xf32>
    %19 = arith.mulf %14, %18 : vector<4x1x8xf32>
    %c0_12 = arith.constant 0 : index
    %c0_13 = arith.constant 0 : index
    %c0_14 = arith.constant 0 : index
    %20 = vector.load %arg5[%c0_12, %c0_13, %c0_14] : memref<4x1x8xf32, #tpu.memory_space<vmem>>, vector<4x1x8xf32>
    tpu.vector_store %arg5[%c0_12, %c0_13, %c0_14], %19 {strides = array<i32>} : memref<4x1x8xf32, #tpu.memory_space<vmem>>, vector<4x1x8xf32>,
    %c0_15 = arith.constant 0 : index
    %c0_16 = arith.constant 0 : index
    %c0_17 = arith.constant 0 : index
    %21 = vector.load %arg3[%c0_15, %c0_16, %c0_17] : memref<4x8x32xf32, #tpu.memory_space<vmem>>, vector<4x8x32xf32>
    "tpu.trace_start"() <{level = 10 : i32, message = "bqt,btv->bqv"}> : () -> ()
    %cst_18 = arith.constant dense<0.000000e+00> : vector<4x1x32xf32>
    %22 = tpu.matmul %19, %21, %cst_18 {dimension_numbers = #tpu.dot_dimension_numbers<[2], [1], [1], [2], [0, 0, 0, 1, 1, 2], [0], [0]>} : vector<4x1x8xf32>, vector<4x8x32xf32>, vector<4x1x32xf32> -> vector<4x1x32xf32>
    "tpu.trace_stop"() : () -> ()
    %c0_19 = arith.constant 0 : index
    %c0_20 = arith.constant 0 : index
    %c0_21 = arith.constant 0 : index
    %23 = vector.load %arg6[%c0_19, %c0_20, %c0_21] : memref<4x1x32xf32, #tpu.memory_space<vmem>>, vector<4x1x32xf32>
    tpu.vector_store %arg6[%c0_19, %c0_20, %c0_21], %22 {strides = array<i32>} : memref<4x1x32xf32, #tpu.memory_space<vmem>>, vector<4x1x32xf32>,
    return
  }
  func.func @transform_0(%arg0: i32) -> (i32, i32, i32) {
    %c0_i32 = arith.constant 0 : i32
    %c0_i32_0 = arith.constant 0 : i32
    %c0_i32_1 = arith.constant 0 : i32
    return %arg0, %c0_i32, %c0_i32_0 : i32, i32, i32
  }
  func.func @transform_1(%arg0: i32) -> (i32, i32, i32) {
    %c0_i32 = arith.constant 0 : i32
    %c0_i32_0 = arith.constant 0 : i32
    %c0_i32_1 = arith.constant 0 : i32
    return %arg0, %c0_i32, %c0_i32_0 : i32, i32, i32
  }
  func.func @transform_2(%arg0: i32) -> (i32, i32, i32) {
    %c0_i32 = arith.constant 0 : i32
    %c0_i32_0 = arith.constant 0 : i32
    %c0_i32_1 = arith.constant 0 : i32
    return %arg0, %c0_i32, %c0_i32_0 : i32, i32, i32
  }
  func.func @transform_3(%arg0: i32) -> (i32, i32, i32) {
    %c0_i32 = arith.constant 0 : i32
    %c0_i32_0 = arith.constant 0 : i32
    %c0_i32_1 = arith.constant 0 : i32
    return %arg0, %c0_i32, %c0_i32_0 : i32, i32, i32
  }
  func.func @transform_4(%arg0: i32) -> (i32, i32, i32) {
    %c0_i32 = arith.constant 0 : i32
    %c0_i32_0 = arith.constant 0 : i32
    %c0_i32_1 = arith.constant 0 : i32
    return %arg0, %c0_i32, %c0_i32_0 : i32, i32, i32
  }
  func.func @transform_5(%arg0: i32) -> (i32, i32, i32) {
    %c0_i32 = arith.constant 0 : i32
    %c0_i32_0 = arith.constant 0 : i32
    %c0_i32_1 = arith.constant 0 : i32
    return %arg0, %c0_i32, %c0_i32_0 : i32, i32, i32
  }
}

</mosaic_0001>

<llo_original>
// kernel: tpu_custom_call.1
$region0: #{tpu_custom_call.1}
  #allocation0 [shape = 'u32[]', space=smem, size = 0x4, offset = 0x4, fixed_abs, tag = 'smem constant byte address 0x4 - core index']
  #allocation1 [shape = 'u32[144,128]{1,0:T(1,128)}', space=vmem, size = 0x12000, scoped, tag = 'internal scratch']
  %s0 = inlined_call_operand.vmem [shape: f32[4,1,32], index: 0, kind: input, shape index: {}]
  %s1 = inlined_call_operand.vmem [shape: f32[4,32,8], index: 1, kind: input, shape index: {}]
  %s2 = inlined_call_operand.vmem [shape: f32[8,4,32], index: 2, kind: input, shape index: {}]
  %s3 = inlined_call_operand.vmem [shape: s32[4,8], index: 3, kind: input, shape index: {}]
  %s4 = inlined_call_operand.hbm [shape: f32[4,8], index: 4, kind: output, shape index: {0}]
  %s5 = inlined_call_operand.hbm [shape: f32[4,32], index: 5, kind: output, shape index: {1}]
  %6 = xla_tuple %s4, %s5
  %s7 = sld [smem:[#allocation0]]
  $region34: #{tpu_custom_call.1} parent=0
    _
  %s9 = ssub.s32 1, %s7
  %s10 = scalar_select 0, %s9, %s7
  $region1: #{tpu_custom_call.1} parent=0
    #allocation2 [shape = 'u8[2048]{0}', space=vmem, size = 0x800, scoped, tag = 'output window, operand 0, single buffered']
    #allocation3 [shape = 's32[1]{0}', space=sflag, size = 0x4, scoped, tag = 'scoped memory for tpu_custom_call.1']
    #allocation4 [shape = 'u8[2048]{0}', space=vmem, size = 0x800, scoped, tag = 'output window, operand 1, single buffered']
    #allocation5 [shape = 's32[1]{0}', space=sflag, size = 0x4, scoped, tag = 'scoped memory for tpu_custom_call.1']
    %11 = vsyncpa [#allocation3], 0
    %12 = vsyncpa [#allocation5], 0
    // Predicated region
    $region2: #{tpu_custom_call.1} parent=1 // pred_check
      _
    $region3: #{tpu_custom_call.1} parent=1 // pred_check_branch
      %14 = sbr.rel (0) target = $region5
    $region4: #{tpu_custom_call.1} parent=1 // pred_region
      _
    $region5: #{tpu_custom_call.1} parent=1 // pred_fallthru
      _
    // Predicated region
    $region6: #{tpu_custom_call.1} parent=1 // pred_check
      _
    $region7: #{tpu_custom_call.1} parent=1 // pred_check_branch
      %16 = sbr.rel (0) target = $region9
    $region8: #{tpu_custom_call.1} parent=1 // pred_region
      _
    $region9: #{tpu_custom_call.1} parent=1 // pred_fallthru
      _
    // Predicated region
    $region10: #{tpu_custom_call.1} parent=1 // pred_check
      _
    $region11: #{tpu_custom_call.1} parent=1 // pred_check_branch
      %18 = sbr.rel (0) target = $region13
    $region12: #{tpu_custom_call.1} parent=1 // pred_region
      _
    $region13: #{tpu_custom_call.1} parent=1 // pred_fallthru
      _
    // Predicated region
    $region14: #{tpu_custom_call.1} parent=1 // pred_check
      _
    $region15: #{tpu_custom_call.1} parent=1 // pred_check_branch
      %20 = sbr.rel (0) target = $region17
    $region16: #{tpu_custom_call.1} parent=1 // pred_region
      _
    $region17: #{tpu_custom_call.1} parent=1 // pred_fallthru
      _
    %v21 = vld [vmem:[%s0] sm:$0x1]
    %v22 = vld [vmem:[%s0 + $0x1] sm:$0x1]
    %v23 = vld [vmem:[%s0 + $0x2] sm:$0x1]
    %v24 = vld [vmem:[%s0 + $0x3] sm:$0x1]
    %v25 = vld [vmem:[%s1] sm:$0xff]
    %v26 = vld [vmem:[%s1 + $0x8] sm:$0xff]
    %v27 = vld [vmem:[%s1 + $0x10] sm:$0xff]
    %v28 = vld [vmem:[%s1 + $0x18] sm:$0xff]
    %v29 = vld [vmem:[%s1 + $0x20] sm:$0xff]
    %v30 = vld [vmem:[%s1 + $0x28] sm:$0xff]
    %v31 = vld [vmem:[%s1 + $0x30] sm:$0xff]
    %v32 = vld [vmem:[%s1 + $0x38] sm:$0xff]
    %v33 = vld [vmem:[%s1 + $0x40] sm:$0xff]
    %v34 = vld [vmem:[%s1 + $0x48] sm:$0xff]
    %v35 = vld [vmem:[%s1 + $0x50] sm:$0xff]
    %v36 = vld [vmem:[%s1 + $0x58] sm:$0xff]
    %v37 = vld [vmem:[%s1 + $0x60] sm:$0xff]
    %v38 = vld [vmem:[%s1 + $0x68] sm:$0xff]
    %v39 = vld [vmem:[%s1 + $0x70] sm:$0xff]
    %v40 = vld [vmem:[%s1 + $0x78] sm:$0xff]
    %vm41 = vcmask 261120
    %v43 = vsel %vm41, %v21, 0
    %45 = vmatprep.subr.mxu0 0.0
    %46 = vmatpush1.msra.mxu0 %v25
    %47 = vmatprep.subr.mxu0 0.0
    %48 = vmatpush1.msra.mxu0 %v26
    %49 = vmatprep.subr.mxu0 0.0
    %50 = vmatpush1.msra.mxu0 %v27
    %51 = vmatprep.subr.mxu0 0.0
    %52 = vmatpush1.msra.mxu0 %v28
    %53 = vmatprep.subr.mxu0 0.0
    %54 = vmatpush1.msra.mxu0 0.0
    %55 = vmatprep.subr.mxu0 0.0
    %56 = vmatpush1.msra.mxu0 0.0
    %57 = vmatprep.subr.mxu0 0.0
    %58 = vmatpush1.msra.mxu0 0.0
    %59 = vmatprep.subr.mxu0 0.0
    %60 = vmatpush1.msra.mxu0 0.0
    %61 = vmatprep.subr.mxu0 0.0
    %62 = vmatpush1.msra.mxu0 0.0
    %63 = vmatprep.subr.mxu0 0.0
    %64 = vmatpush1.msra.mxu0 0.0
    %65 = vmatprep.subr.mxu0 0.0
    %66 = vmatpush1.msra.mxu0 0.0
    %67 = vmatprep.subr.mxu0 0.0
    %68 = vmatpush1.msra.mxu0 0.0
    %69 = vmatprep.subr.mxu0 0.0
    %70 = vmatpush1.msra.mxu0 0.0
    %71 = vmatprep.subr.mxu0 0.0
    %72 = vmatpush1.msra.mxu0 0.0
    %73 = vmatprep.subr.mxu0 0.0
    %74 = vmatpush1.msra.mxu0 0.0
    %75 = vmatprep.subr.mxu0 0.0
    %76 = vmatpush1.msra.mxu0 0.0
    %77 = vmatprep.subr.mxu0 0.0
    %78 = vmatpush1.msra.mxu0 0.0
    %79 = vmatprep.subr.mxu0 0.0
    %80 = vmatpush1.msra.mxu0 0.0
    %81 = vmatprep.subr.mxu0 0.0
    %82 = vmatpush1.msra.mxu0 0.0
    %83 = vmatprep.subr.mxu0 0.0
    %84 = vmatpush1.msra.mxu0 0.0
    %85 = vmatprep.subr.mxu0 0.0
    %86 = vmatpush1.msra.mxu0 0.0
    %87 = vmatprep.subr.mxu0 0.0
    %88 = vmatpush1.msra.mxu0 0.0
    %89 = vmatprep.subr.mxu0 0.0
    %90 = vmatpush1.msra.mxu0 0.0
    %91 = vmatprep.subr.mxu0 0.0
    %92 = vmatpush1.msra.mxu0 0.0
    %93 = vmatprep.subr.mxu0 0.0
    %94 = vmatpush1.msra.mxu0 0.0
    %95 = vmatprep.subr.mxu0 0.0
    %96 = vmatpush1.msra.mxu0 0.0
    %97 = vmatprep.subr.mxu0 0.0
    %98 = vmatpush1.msra.mxu0 0.0
    %99 = vmatprep.subr.mxu0 0.0
    %100 = vmatpush1.msra.mxu0 0.0
    %101 = vmatprep.subr.mxu0 0.0
    %102 = vmatpush1.msra.mxu0 0.0
    %103 = vmatprep.subr.mxu0 0.0
    %104 = vmatpush1.msra.mxu0 0.0
    %105 = vmatprep.subr.mxu0 0.0
    %106 = vmatpush1.msra.mxu0 0.0
    %107 = vmatprep.subr.mxu0 0.0
    %108 = vmatpush1.msra.mxu0 0.0
    %109 = vmatprep.mubr.f32.mxu0 0.0
    %110 = vmatmul.mubr.f32.gmra.mrb[0].mxu0 %v43
    %v111 = vpop.f32.mrb[0].mxu0
    %v112 = vadd.f32 0.0, %v111
    %v113 = vpop.f32.mrb[0].mxu0
    %114 = vdwg.mxu0
    %v116 = vsel %vm41, %v22, 0
    %118 = vmatprep.subr.mxu0 0.0
    %119 = vmatpush1.msra.mxu0 %v29
    %120 = vmatprep.subr.mxu0 0.0
    %121 = vmatpush1.msra.mxu0 %v30
    %122 = vmatprep.subr.mxu0 0.0
    %123 = vmatpush1.msra.mxu0 %v31
    %124 = vmatprep.subr.mxu0 0.0
    %125 = vmatpush1.msra.mxu0 %v32
    %126 = vmatprep.subr.mxu0 0.0
    %127 = vmatpush1.msra.mxu0 0.0
    %128 = vmatprep.subr.mxu0 0.0
    %129 = vmatpush1.msra.mxu0 0.0
    %130 = vmatprep.subr.mxu0 0.0
    %131 = vmatpush1.msra.mxu0 0.0
    %132 = vmatprep.subr.mxu0 0.0
    %133 = vmatpush1.msra.mxu0 0.0
    %134 = vmatprep.subr.mxu0 0.0
    %135 = vmatpush1.msra.mxu0 0.0
    %136 = vmatprep.subr.mxu0 0.0
    %137 = vmatpush1.msra.mxu0 0.0
    %138 = vmatprep.subr.mxu0 0.0
    %139 = vmatpush1.msra.mxu0 0.0
    %140 = vmatprep.subr.mxu0 0.0
    %141 = vmatpush1.msra.mxu0 0.0
    %142 = vmatprep.subr.mxu0 0.0
    %143 = vmatpush1.msra.mxu0 0.0
    %144 = vmatprep.subr.mxu0 0.0
    %145 = vmatpush1.msra.mxu0 0.0
    %146 = vmatprep.subr.mxu0 0.0
    %147 = vmatpush1.msra.mxu0 0.0
    %148 = vmatprep.subr.mxu0 0.0
    %149 = vmatpush1.msra.mxu0 0.0
    %150 = vmatprep.subr.mxu0 0.0
    %151 = vmatpush1.msra.mxu0 0.0
    %152 = vmatprep.subr.mxu0 0.0
    %153 = vmatpush1.msra.mxu0 0.0
    %154 = vmatprep.subr.mxu0 0.0
    %155 = vmatpush1.msra.mxu0 0.0
    %156 = vmatprep.subr.mxu0 0.0
    %157 = vmatpush1.msra.mxu0 0.0
    %158 = vmatprep.subr.mxu0 0.0
    %159 = vmatpush1.msra.mxu0 0.0
    %160 = vmatprep.subr.mxu0 0.0
    %161 = vmatpush1.msra.mxu0 0.0
    %162 = vmatprep.subr.mxu0 0.0
    %163 = vmatpush1.msra.mxu0 0.0
    %164 = vmatprep.subr.mxu0 0.0
    %165 = vmatpush1.msra.mxu0 0.0
    %166 = vmatprep.subr.mxu0 0.0
    %167 = vmatpush1.msra.mxu0 0.0
    %168 = vmatprep.subr.mxu0 0.0
    %169 = vmatpush1.msra.mxu0 0.0
    %170 = vmatprep.subr.mxu0 0.0
    %171 = vmatpush1.msra.mxu0 0.0
    %172 = vmatprep.subr.mxu0 0.0
    %173 = vmatpush1.msra.mxu0 0.0
    %174 = vmatprep.subr.mxu0 0.0
    %175 = vmatpush1.msra.mxu0 0.0
    %176 = vmatprep.subr.mxu0 0.0
    %177 = vmatpush1.msra.mxu0 0.0
    %178 = vmatprep.subr.mxu0 0.0
    %179 = vmatpush1.msra.mxu0 0.0
    %180 = vmatprep.subr.mxu0 0.0
    %181 = vmatpush1.msra.mxu0 0.0
    %182 = vmatprep.mubr.f32.mxu0 0.0
    %183 = vmatmul.mubr.f32.gmra.mrb[0].mxu0 %v116
    %v184 = vpop.f32.mrb[0].mxu0
    %v185 = vadd.f32 0.0, %v184
    %v186 = vpop.f32.mrb[0].mxu0
    %187 = vdwg.mxu0
    %v189 = vsel %vm41, %v23, 0
    %191 = vmatprep.subr.mxu0 0.0
    %192 = vmatpush1.msra.mxu0 %v33
    %193 = vmatprep.subr.mxu0 0.0
    %194 = vmatpush1.msra.mxu0 %v34
    %195 = vmatprep.subr.mxu0 0.0
    %196 = vmatpush1.msra.mxu0 %v35
    %197 = vmatprep.subr.mxu0 0.0
    %198 = vmatpush1.msra.mxu0 %v36
    %199 = vmatprep.subr.mxu0 0.0
    %200 = vmatpush1.msra.mxu0 0.0
    %201 = vmatprep.subr.mxu0 0.0
    %202 = vmatpush1.msra.mxu0 0.0
    %203 = vmatprep.subr.mxu0 0.0
    %204 = vmatpush1.msra.mxu0 0.0
    %205 = vmatprep.subr.mxu0 0.0
    %206 = vmatpush1.msra.mxu0 0.0
    %207 = vmatprep.subr.mxu0 0.0
    %208 = vmatpush1.msra.mxu0 0.0
    %209 = vmatprep.subr.mxu0 0.0
    %210 = vmatpush1.msra.mxu0 0.0
    %211 = vmatprep.subr.mxu0 0.0
    %212 = vmatpush1.msra.mxu0 0.0
    %213 = vmatprep.subr.mxu0 0.0
    %214 = vmatpush1.msra.mxu0 0.0
    %215 = vmatprep.subr.mxu0 0.0
    %216 = vmatpush1.msra.mxu0 0.0
    %217 = vmatprep.subr.mxu0 0.0
    %218 = vmatpush1.msra.mxu0 0.0
    %219 = vmatprep.subr.mxu0 0.0
    %220 = vmatpush1.msra.mxu0 0.0
    %221 = vmatprep.subr.mxu0 0.0
    %222 = vmatpush1.msra.mxu0 0.0
    %223 = vmatprep.subr.mxu0 0.0
    %224 = vmatpush1.msra.mxu0 0.0
    %225 = vmatprep.subr.mxu0 0.0
    %226 = vmatpush1.msra.mxu0 0.0
    %227 = vmatprep.subr.mxu0 0.0
    %228 = vmatpush1.msra.mxu0 0.0
    %229 = vmatprep.subr.mxu0 0.0
    %230 = vmatpush1.msra.mxu0 0.0
    %231 = vmatprep.subr.mxu0 0.0
    %232 = vmatpush1.msra.mxu0 0.0
    %233 = vmatprep.subr.mxu0 0.0
    %234 = vmatpush1.msra.mxu0 0.0
    %235 = vmatprep.subr.mxu0 0.0
    %236 = vmatpush1.msra.mxu0 0.0
    %237 = vmatprep.subr.mxu0 0.0
    %238 = vmatpush1.msra.mxu0 0.0
    %239 = vmatprep.subr.mxu0 0.0
    %240 = vmatpush1.msra.mxu0 0.0
    %241 = vmatprep.subr.mxu0 0.0
    %242 = vmatpush1.msra.mxu0 0.0
    %243 = vmatprep.subr.mxu0 0.0
    %244 = vmatpush1.msra.mxu0 0.0
    %245 = vmatprep.subr.mxu0 0.0
    %246 = vmatpush1.msra.mxu0 0.0
    %247 = vmatprep.subr.mxu0 0.0
    %248 = vmatpush1.msra.mxu0 0.0
    %249 = vmatprep.subr.mxu0 0.0
    %250 = vmatpush1.msra.mxu0 0.0
    %251 = vmatprep.subr.mxu0 0.0
    %252 = vmatpush1.msra.mxu0 0.0
    %253 = vmatprep.subr.mxu0 0.0
    %254 = vmatpush1.msra.mxu0 0.0
    %255 = vmatprep.mubr.f32.mxu0 0.0
    %256 = vmatmul.mubr.f32.gmra.mrb[0].mxu0 %v189
    %v257 = vpop.f32.mrb[0].mxu0
    %v258 = vadd.f32 0.0, %v257
    %v259 = vpop.f32.mrb[0].mxu0
    %260 = vdwg.mxu0
    %v262 = vsel %vm41, %v24, 0
    %264 = vmatprep.subr.mxu0 0.0
    %265 = vmatpush1.msra.mxu0 %v37
    %266 = vmatprep.subr.mxu0 0.0
    %267 = vmatpush1.msra.mxu0 %v38
    %268 = vmatprep.subr.mxu0 0.0
    %269 = vmatpush1.msra.mxu0 %v39
    %270 = vmatprep.subr.mxu0 0.0
    %271 = vmatpush1.msra.mxu0 %v40
    %272 = vmatprep.subr.mxu0 0.0
    %273 = vmatpush1.msra.mxu0 0.0
    %274 = vmatprep.subr.mxu0 0.0
    %275 = vmatpush1.msra.mxu0 0.0
    %276 = vmatprep.subr.mxu0 0.0
    %277 = vmatpush1.msra.mxu0 0.0
    %278 = vmatprep.subr.mxu0 0.0
    %279 = vmatpush1.msra.mxu0 0.0
    %280 = vmatprep.subr.mxu0 0.0
    %281 = vmatpush1.msra.mxu0 0.0
    %282 = vmatprep.subr.mxu0 0.0
    %283 = vmatpush1.msra.mxu0 0.0
    %284 = vmatprep.subr.mxu0 0.0
    %285 = vmatpush1.msra.mxu0 0.0
    %286 = vmatprep.subr.mxu0 0.0
    %287 = vmatpush1.msra.mxu0 0.0
    %288 = vmatprep.subr.mxu0 0.0
    %289 = vmatpush1.msra.mxu0 0.0
    %290 = vmatprep.subr.mxu0 0.0
    %291 = vmatpush1.msra.mxu0 0.0
    %292 = vmatprep.subr.mxu0 0.0
    %293 = vmatpush1.msra.mxu0 0.0
    %294 = vmatprep.subr.mxu0 0.0
    %295 = vmatpush1.msra.mxu0 0.0
    %296 = vmatprep.subr.mxu0 0.0
    %297 = vmatpush1.msra.mxu0 0.0
    %298 = vmatprep.subr.mxu0 0.0
    %299 = vmatpush1.msra.mxu0 0.0
    %300 = vmatprep.subr.mxu0 0.0
    %301 = vmatpush1.msra.mxu0 0.0
    %302 = vmatprep.subr.mxu0 0.0
    %303 = vmatpush1.msra.mxu0 0.0
    %304 = vmatprep.subr.mxu0 0.0
    %305 = vmatpush1.msra.mxu0 0.0
    %306 = vmatprep.subr.mxu0 0.0
    %307 = vmatpush1.msra.mxu0 0.0
    %308 = vmatprep.subr.mxu0 0.0
    %309 = vmatpush1.msra.mxu0 0.0
    %310 = vmatprep.subr.mxu0 0.0
    %311 = vmatpush1.msra.mxu0 0.0
    %312 = vmatprep.subr.mxu0 0.0
    %313 = vmatpush1.msra.mxu0 0.0
    %314 = vmatprep.subr.mxu0 0.0
    %315 = vmatpush1.msra.mxu0 0.0
    %316 = vmatprep.subr.mxu0 0.0
    %317 = vmatpush1.msra.mxu0 0.0
    %318 = vmatprep.subr.mxu0 0.0
    %319 = vmatpush1.msra.mxu0 0.0
    %320 = vmatprep.subr.mxu0 0.0
    %321 = vmatpush1.msra.mxu0 0.0
    %322 = vmatprep.subr.mxu0 0.0
    %323 = vmatpush1.msra.mxu0 0.0
    %324 = vmatprep.subr.mxu0 0.0
    %325 = vmatpush1.msra.mxu0 0.0
    %326 = vmatprep.subr.mxu0 0.0
    %327 = vmatpush1.msra.mxu0 0.0
    %328 = vmatprep.mubr.f32.mxu0 0.0
    %329 = vmatmul.mubr.f32.gmra.mrb[0].mxu0 %v262
    %v330 = vpop.f32.mrb[0].mxu0
    %v331 = vadd.f32 0.0, %v330
    %v332 = vpop.f32.mrb[0].mxu0
    %333 = vdwg.mxu0
    %v334 = vadd.f32 %v112, 0.0
    %v335 = vadd.f32 %v185, 0.0
    %v336 = vadd.f32 %v258, 0.0
    %v337 = vadd.f32 %v331, 0.0
    %v338 = vld [vmem:[%s3] sm:$0xf]
    %vm339 = vcmp.ne.s32.totalorder %v338, 0
    %v344 = vrot.slane %v335, 7
    %vm345 = vcmask 1041409
    %v346 = vsel %vm345, %v344, %v334
    %v347 = vrot.slane %v336, 6
    %vm348 = vcmask 1042434
    %v349 = vsel %vm348, %v347, %v346
    %v350 = vrot.slane %v337, 5
    %vm351 = vcmask 1043459
    %v352 = vsel %vm351, %v350, %v349
    %v354 = vsel %vm339, 0.0, %v352
    %v355 = vmul.f32 %v354, 0.17677669
    %vm356 = vcmask 60416
    %v357 = vsel %vm356, %v355, -inf
    %358 = vmax.xlane.f32.xlu0 %v357
    %v359 = vpop.xlane.xlu0 %358
    %v360 = vsub.f32 %v355, %v359
    %v361 = vmul.f32 %v360, 1.442695
    %v362 = vpow.pop %v361
    %v363 = vsel %vm356, %v362, 0.0
    %364 = vadd.xlane.f32.xlu0 %v363
    %v365 = vpop.xlane.xlu0 %364
    %v366 = vrcp.pop %v365
    %v367 = vmul.f32 %v362, %v366
    %368 = vst.msk [vmem:[#allocation2] sm:$0xf] %vm356, %v367
    %v369 = vld [vmem:[%s2] sm:$0xf]
    %371 = vset.pattern.permute.xlu0 0
    %372 = vperm.xlu0 %371, %v367
    %v373 = vpop.permute.xlu0 %372
    %v375 = vmul.f32 %v373, %v369
    %v376 = vadd.f32 %v375, 0.0
    %s377 = scalar_lea.vmem %s2, 4
    %v378 = vld [vmem:[%s377] sm:$0xf]
    %379 = vset.pattern.permute.xlu0 1
    %380 = vperm.xlu0 %379, %v367
    %v381 = vpop.permute.xlu0 %380
    %v383 = vmul.f32 %v381, %v378
    %v384 = vadd.f32 %v376, %v383
    %s385 = scalar_lea.vmem %s2, 8
    %v386 = vld [vmem:[%s385] sm:$0xf]
    %387 = vset.pattern.permute.xlu0 2
    %388 = vperm.xlu0 %387, %v367
    %v389 = vpop.permute.xlu0 %388
    %v391 = vmul.f32 %v389, %v386
    %v392 = vadd.f32 %v384, %v391
    %s393 = scalar_lea.vmem %s2, 12
    %v394 = vld [vmem:[%s393] sm:$0xf]
    %395 = vset.pattern.permute.xlu0 3
    %396 = vperm.xlu0 %395, %v367
    %v397 = vpop.permute.xlu0 %396
    %v399 = vmul.f32 %v397, %v394
    %v400 = vadd.f32 %v392, %v399
    %s401 = scalar_lea.vmem %s2, 16
    %v402 = vld [vmem:[%s401] sm:$0xf]
    %403 = vset.pattern.permute.xlu0 4
    %404 = vperm.xlu0 %403, %v367
    %v405 = vpop.permute.xlu0 %404
    %v407 = vmul.f32 %v405, %v402
    %v408 = vadd.f32 %v400, %v407
    %s409 = scalar_lea.vmem %s2, 20
    %v410 = vld [vmem:[%s409] sm:$0xf]
    %411 = vset.pattern.permute.xlu0 5
    %412 = vperm.xlu0 %411, %v367
    %v413 = vpop.permute.xlu0 %412
    %v415 = vmul.f32 %v413, %v410
    %v416 = vadd.f32 %v408, %v415
    %s417 = scalar_lea.vmem %s2, 24
    %v418 = vld [vmem:[%s417] sm:$0xf]
    %419 = vset.pattern.permute.xlu0 6
    %420 = vperm.xlu0 %419, %v367
    %v421 = vpop.permute.xlu0 %420
    %v423 = vmul.f32 %v421, %v418
    %v424 = vadd.f32 %v416, %v423
    %s425 = scalar_lea.vmem %s2, 28
    %v426 = vld [vmem:[%s425] sm:$0xf]
    %427 = vset.pattern.permute.xlu0 7
    %428 = vperm.xlu0 %427, %v367
    %v429 = vpop.permute.xlu0 %428
    %v431 = vmul.f32 %v429, %v426
    %v432 = vadd.f32 %v424, %v431
    %vm433 = vcmask 257024
    %434 = vst.msk [vmem:[#allocation4] sm:$0xf] %vm433, %v432
    // Predicated region
    $region18: #{tpu_custom_call.1} parent=1 // pred_check
      _
    $region19: #{tpu_custom_call.1} parent=1 // pred_check_branch
      %436 = sbr.rel (0) target = $region21
    $region20: #{tpu_custom_call.1} parent=1 // pred_region
      %s438 = ssub.s32 64, 64
      %439 = vsyncadd [#allocation3], %s438
      %s441 = sshll.u32 [#allocation2], 4
      %s442 = int_to_ptr.vmem [resolvable:$true] %s441
      %444 = dma.vmem_to_hbm [thread:$0]  %s442, 64, %s4, [#allocation3]
    $region21: #{tpu_custom_call.1} parent=1 // pred_fallthru
      _
    // Predicated region
    $region22: #{tpu_custom_call.1} parent=1 // pred_check
      _
    $region23: #{tpu_custom_call.1} parent=1 // pred_check_branch
      %446 = sbr.rel (0) target = $region25
    $region24: #{tpu_custom_call.1} parent=1 // pred_region
      %s448 = ssub.s32 64, 64
      %449 = vsyncadd [#allocation5], %s448
      %s451 = sshll.u32 [#allocation4], 4
      %s452 = int_to_ptr.vmem [resolvable:$true] %s451
      %454 = dma.vmem_to_hbm [thread:$0]  %s452, 64, %s5, [#allocation5]
    $region25: #{tpu_custom_call.1} parent=1 // pred_fallthru
      _
    // Predicated region
    $region26: #{tpu_custom_call.1} parent=1 // pred_check
      _
    $region27: #{tpu_custom_call.1} parent=1 // pred_check_branch
      %456 = sbr.rel (0) target = $region29
    $region28: #{tpu_custom_call.1} parent=1 // pred_region
      %457 = dma.done [#allocation3], 64
    $region29: #{tpu_custom_call.1} parent=1 // pred_fallthru
      _
    // Predicated region
    $region30: #{tpu_custom_call.1} parent=1 // pred_check
      _
    $region31: #{tpu_custom_call.1} parent=1 // pred_check_branch
      %459 = sbr.rel (0) target = $region33
    $region32: #{tpu_custom_call.1} parent=1 // pred_region
      %460 = dma.done [#allocation5], 64
    $region33: #{tpu_custom_call.1} parent=1 // pred_fallthru
      _
    %461 = vsyncpa [#allocation3], 1
    %462 = vsyncpa [#allocation5], 1

// kernel: tpu_custom_call.1
$region0: #{tpu_custom_call.1}
  #allocation0 [shape = 'u32[]', space=smem, size = 0x4, offset = 0x4, fixed_abs, tag = 'smem constant byte address 0x4 - core index']
  #allocation1 [shape = 'u32[144,128]{1,0:T(1,128)}', space=vmem, size = 0x12000, scoped, tag = 'internal scratch']
  %s0 = inlined_call_operand.vmem [shape: f32[4,1,32], index: 0, kind: input, shape index: {}]
  %s1 = inlined_call_operand.vmem [shape: f32[4,32,8], index: 1, kind: input, shape index: {}]
  %s2 = inlined_call_operand.vmem [shape: f32[4,8,32], index: 2, kind: input, shape index: {}]
  %s3 = inlined_call_operand.vmem [shape: s32[4,1,8], index: 3, kind: input, shape index: {}]
  %s4 = inlined_call_operand.hbm [shape: f32[4,1,8], index: 4, kind: output, shape index: {0}]
  %s5 = inlined_call_operand.hbm [shape: f32[4,1,32], index: 5, kind: output, shape index: {1}]
  %6 = xla_tuple %s4, %s5
  %s7 = sld [smem:[#allocation0]]
  $region34: #{tpu_custom_call.1} parent=0
    _
  %s9 = ssub.s32 1, %s7
  %s10 = scalar_select 0, %s9, %s7
  $region1: #{tpu_custom_call.1} parent=0
    #allocation2 [shape = 'u8[2048]{0}', space=vmem, size = 0x800, scoped, tag = 'output window, operand 0, single buffered']
    #allocation3 [shape = 's32[1]{0}', space=sflag, size = 0x4, scoped, tag = 'scoped memory for tpu_custom_call.1']
    #allocation4 [shape = 'u8[2048]{0}', space=vmem, size = 0x800, scoped, tag = 'output window, operand 1, single buffered']
    #allocation5 [shape = 's32[1]{0}', space=sflag, size = 0x4, scoped, tag = 'scoped memory for tpu_custom_call.1']
    %11 = vsyncpa [#allocation3], 0
    %12 = vsyncpa [#allocation5], 0
    // Predicated region
    $region2: #{tpu_custom_call.1} parent=1 // pred_check
      _
    $region3: #{tpu_custom_call.1} parent=1 // pred_check_branch
      %14 = sbr.rel (0) target = $region5
    $region4: #{tpu_custom_call.1} parent=1 // pred_region
      _
    $region5: #{tpu_custom_call.1} parent=1 // pred_fallthru
      _
    // Predicated region
    $region6: #{tpu_custom_call.1} parent=1 // pred_check
      _
    $region7: #{tpu_custom_call.1} parent=1 // pred_check_branch
      %16 = sbr.rel (0) target = $region9
    $region8: #{tpu_custom_call.1} parent=1 // pred_region
      _
    $region9: #{tpu_custom_call.1} parent=1 // pred_fallthru
      _
    // Predicated region
    $region10: #{tpu_custom_call.1} parent=1 // pred_check
      _
    $region11: #{tpu_custom_call.1} parent=1 // pred_check_branch
      %18 = sbr.rel (0) target = $region13
    $region12: #{tpu_custom_call.1} parent=1 // pred_region
      _
    $region13: #{tpu_custom_call.1} parent=1 // pred_fallthru
      _
    // Predicated region
    $region14: #{tpu_custom_call.1} parent=1 // pred_check
      _
    $region15: #{tpu_custom_call.1} parent=1 // pred_check_branch
      %20 = sbr.rel (0) target = $region17
    $region16: #{tpu_custom_call.1} parent=1 // pred_region
      _
    $region17: #{tpu_custom_call.1} parent=1 // pred_fallthru
      _
    %v21 = vld [vmem:[%s0] sm:$0x1]
    %v22 = vld [vmem:[%s0 + $0x1] sm:$0x1]
    %v23 = vld [vmem:[%s0 + $0x2] sm:$0x1]
    %v24 = vld [vmem:[%s0 + $0x3] sm:$0x1]
    %v25 = vld [vmem:[%s1] sm:$0xff]
    %v26 = vld [vmem:[%s1 + $0x8] sm:$0xff]
    %v27 = vld [vmem:[%s1 + $0x10] sm:$0xff]
    %v28 = vld [vmem:[%s1 + $0x18] sm:$0xff]
    %v29 = vld [vmem:[%s1 + $0x20] sm:$0xff]
    %v30 = vld [vmem:[%s1 + $0x28] sm:$0xff]
    %v31 = vld [vmem:[%s1 + $0x30] sm:$0xff]
    %v32 = vld [vmem:[%s1 + $0x38] sm:$0xff]
    %v33 = vld [vmem:[%s1 + $0x40] sm:$0xff]
    %v34 = vld [vmem:[%s1 + $0x48] sm:$0xff]
    %v35 = vld [vmem:[%s1 + $0x50] sm:$0xff]
    %v36 = vld [vmem:[%s1 + $0x58] sm:$0xff]
    %v37 = vld [vmem:[%s1 + $0x60] sm:$0xff]
    %v38 = vld [vmem:[%s1 + $0x68] sm:$0xff]
    %v39 = vld [vmem:[%s1 + $0x70] sm:$0xff]
    %v40 = vld [vmem:[%s1 + $0x78] sm:$0xff]
    %vm41 = vcmask 261120
    %v43 = vsel %vm41, %v21, 0
    %45 = vmatprep.subr.mxu0 0.0
    %46 = vmatpush1.msra.mxu0 %v25
    %47 = vmatprep.subr.mxu0 0.0
    %48 = vmatpush1.msra.mxu0 %v26
    %49 = vmatprep.subr.mxu0 0.0
    %50 = vmatpush1.msra.mxu0 %v27
    %51 = vmatprep.subr.mxu0 0.0
    %52 = vmatpush1.msra.mxu0 %v28
    %53 = vmatprep.subr.mxu0 0.0
    %54 = vmatpush1.msra.mxu0 0.0
    %55 = vmatprep.subr.mxu0 0.0
    %56 = vmatpush1.msra.mxu0 0.0
    %57 = vmatprep.subr.mxu0 0.0
    %58 = vmatpush1.msra.mxu0 0.0
    %59 = vmatprep.subr.mxu0 0.0
    %60 = vmatpush1.msra.mxu0 0.0
    %61 = vmatprep.subr.mxu0 0.0
    %62 = vmatpush1.msra.mxu0 0.0
    %63 = vmatprep.subr.mxu0 0.0
    %64 = vmatpush1.msra.mxu0 0.0
    %65 = vmatprep.subr.mxu0 0.0
    %66 = vmatpush1.msra.mxu0 0.0
    %67 = vmatprep.subr.mxu0 0.0
    %68 = vmatpush1.msra.mxu0 0.0
    %69 = vmatprep.subr.mxu0 0.0
    %70 = vmatpush1.msra.mxu0 0.0
    %71 = vmatprep.subr.mxu0 0.0
    %72 = vmatpush1.msra.mxu0 0.0
    %73 = vmatprep.subr.mxu0 0.0
    %74 = vmatpush1.msra.mxu0 0.0
    %75 = vmatprep.subr.mxu0 0.0
    %76 = vmatpush1.msra.mxu0 0.0
    %77 = vmatprep.subr.mxu0 0.0
    %78 = vmatpush1.msra.mxu0 0.0
    %79 = vmatprep.subr.mxu0 0.0
    %80 = vmatpush1.msra.mxu0 0.0
    %81 = vmatprep.subr.mxu0 0.0
    %82 = vmatpush1.msra.mxu0 0.0
    %83 = vmatprep.subr.mxu0 0.0
    %84 = vmatpush1.msra.mxu0 0.0
    %85 = vmatprep.subr.mxu0 0.0
    %86 = vmatpush1.msra.mxu0 0.0
    %87 = vmatprep.subr.mxu0 0.0
    %88 = vmatpush1.msra.mxu0 0.0
    %89 = vmatprep.subr.mxu0 0.0
    %90 = vmatpush1.msra.mxu0 0.0
    %91 = vmatprep.subr.mxu0 0.0
    %92 = vmatpush1.msra.mxu0 0.0
    %93 = vmatprep.subr.mxu0 0.0
    %94 = vmatpush1.msra.mxu0 0.0
    %95 = vmatprep.subr.mxu0 0.0
    %96 = vmatpush1.msra.mxu0 0.0
    %97 = vmatprep.subr.mxu0 0.0
    %98 = vmatpush1.msra.mxu0 0.0
    %99 = vmatprep.subr.mxu0 0.0
    %100 = vmatpush1.msra.mxu0 0.0
    %101 = vmatprep.subr.mxu0 0.0
    %102 = vmatpush1.msra.mxu0 0.0
    %103 = vmatprep.subr.mxu0 0.0
    %104 = vmatpush1.msra.mxu0 0.0
    %105 = vmatprep.subr.mxu0 0.0
    %106 = vmatpush1.msra.mxu0 0.0
    %107 = vmatprep.subr.mxu0 0.0
    %108 = vmatpush1.msra.mxu0 0.0
    %109 = vmatprep.mubr.f32.mxu0 0.0
    %110 = vmatmul.mubr.f32.gmra.mrb[0].mxu0 %v43
    %v111 = vpop.f32.mrb[0].mxu0
    %v112 = vadd.f32 0.0, %v111
    %v113 = vpop.f32.mrb[0].mxu0
    %114 = vdwg.mxu0
    %v116 = vsel %vm41, %v22, 0
    %118 = vmatprep.subr.mxu0 0.0
    %119 = vmatpush1.msra.mxu0 %v29
    %120 = vmatprep.subr.mxu0 0.0
    %121 = vmatpush1.msra.mxu0 %v30
    %122 = vmatprep.subr.mxu0 0.0
    %123 = vmatpush1.msra.mxu0 %v31
    %124 = vmatprep.subr.mxu0 0.0
    %125 = vmatpush1.msra.mxu0 %v32
    %126 = vmatprep.subr.mxu0 0.0
    %127 = vmatpush1.msra.mxu0 0.0
    %128 = vmatprep.subr.mxu0 0.0
    %129 = vmatpush1.msra.mxu0 0.0
    %130 = vmatprep.subr.mxu0 0.0
    %131 = vmatpush1.msra.mxu0 0.0
    %132 = vmatprep.subr.mxu0 0.0
    %133 = vmatpush1.msra.mxu0 0.0
    %134 = vmatprep.subr.mxu0 0.0
    %135 = vmatpush1.msra.mxu0 0.0
    %136 = vmatprep.subr.mxu0 0.0
    %137 = vmatpush1.msra.mxu0 0.0
    %138 = vmatprep.subr.mxu0 0.0
    %139 = vmatpush1.msra.mxu0 0.0
    %140 = vmatprep.subr.mxu0 0.0
    %141 = vmatpush1.msra.mxu0 0.0
    %142 = vmatprep.subr.mxu0 0.0
    %143 = vmatpush1.msra.mxu0 0.0
    %144 = vmatprep.subr.mxu0 0.0
    %145 = vmatpush1.msra.mxu0 0.0
    %146 = vmatprep.subr.mxu0 0.0
    %147 = vmatpush1.msra.mxu0 0.0
    %148 = vmatprep.subr.mxu0 0.0
    %149 = vmatpush1.msra.mxu0 0.0
    %150 = vmatprep.subr.mxu0 0.0
    %151 = vmatpush1.msra.mxu0 0.0
    %152 = vmatprep.subr.mxu0 0.0
    %153 = vmatpush1.msra.mxu0 0.0
    %154 = vmatprep.subr.mxu0 0.0
    %155 = vmatpush1.msra.mxu0 0.0
    %156 = vmatprep.subr.mxu0 0.0
    %157 = vmatpush1.msra.mxu0 0.0
    %158 = vmatprep.subr.mxu0 0.0
    %159 = vmatpush1.msra.mxu0 0.0
    %160 = vmatprep.subr.mxu0 0.0
    %161 = vmatpush1.msra.mxu0 0.0
    %162 = vmatprep.subr.mxu0 0.0
    %163 = vmatpush1.msra.mxu0 0.0
    %164 = vmatprep.subr.mxu0 0.0
    %165 = vmatpush1.msra.mxu0 0.0
    %166 = vmatprep.subr.mxu0 0.0
    %167 = vmatpush1.msra.mxu0 0.0
    %168 = vmatprep.subr.mxu0 0.0
    %169 = vmatpush1.msra.mxu0 0.0
    %170 = vmatprep.subr.mxu0 0.0
    %171 = vmatpush1.msra.mxu0 0.0
    %172 = vmatprep.subr.mxu0 0.0
    %173 = vmatpush1.msra.mxu0 0.0
    %174 = vmatprep.subr.mxu0 0.0
    %175 = vmatpush1.msra.mxu0 0.0
    %176 = vmatprep.subr.mxu0 0.0
    %177 = vmatpush1.msra.mxu0 0.0
    %178 = vmatprep.subr.mxu0 0.0
    %179 = vmatpush1.msra.mxu0 0.0
    %180 = vmatprep.subr.mxu0 0.0
    %181 = vmatpush1.msra.mxu0 0.0
    %182 = vmatprep.mubr.f32.mxu0 0.0
    %183 = vmatmul.mubr.f32.gmra.mrb[0].mxu0 %v116
    %v184 = vpop.f32.mrb[0].mxu0
    %v185 = vadd.f32 0.0, %v184
    %v186 = vpop.f32.mrb[0].mxu0
    %187 = vdwg.mxu0
    %v189 = vsel %vm41, %v23, 0
    %191 = vmatprep.subr.mxu0 0.0
    %192 = vmatpush1.msra.mxu0 %v33
    %193 = vmatprep.subr.mxu0 0.0
    %194 = vmatpush1.msra.mxu0 %v34
    %195 = vmatprep.subr.mxu0 0.0
    %196 = vmatpush1.msra.mxu0 %v35
    %197 = vmatprep.subr.mxu0 0.0
    %198 = vmatpush1.msra.mxu0 %v36
    %199 = vmatprep.subr.mxu0 0.0
    %200 = vmatpush1.msra.mxu0 0.0
    %201 = vmatprep.subr.mxu0 0.0
    %202 = vmatpush1.msra.mxu0 0.0
    %203 = vmatprep.subr.mxu0 0.0
    %204 = vmatpush1.msra.mxu0 0.0
    %205 = vmatprep.subr.mxu0 0.0
    %206 = vmatpush1.msra.mxu0 0.0
    %207 = vmatprep.subr.mxu0 0.0
    %208 = vmatpush1.msra.mxu0 0.0
    %209 = vmatprep.subr.mxu0 0.0
    %210 = vmatpush1.msra.mxu0 0.0
    %211 = vmatprep.subr.mxu0 0.0
    %212 = vmatpush1.msra.mxu0 0.0
    %213 = vmatprep.subr.mxu0 0.0
    %214 = vmatpush1.msra.mxu0 0.0
    %215 = vmatprep.subr.mxu0 0.0
    %216 = vmatpush1.msra.mxu0 0.0
    %217 = vmatprep.subr.mxu0 0.0
    %218 = vmatpush1.msra.mxu0 0.0
    %219 = vmatprep.subr.mxu0 0.0
    %220 = vmatpush1.msra.mxu0 0.0
    %221 = vmatprep.subr.mxu0 0.0
    %222 = vmatpush1.msra.mxu0 0.0
    %223 = vmatprep.subr.mxu0 0.0
    %224 = vmatpush1.msra.mxu0 0.0
    %225 = vmatprep.subr.mxu0 0.0
    %226 = vmatpush1.msra.mxu0 0.0
    %227 = vmatprep.subr.mxu0 0.0
    %228 = vmatpush1.msra.mxu0 0.0
    %229 = vmatprep.subr.mxu0 0.0
    %230 = vmatpush1.msra.mxu0 0.0
    %231 = vmatprep.subr.mxu0 0.0
    %232 = vmatpush1.msra.mxu0 0.0
    %233 = vmatprep.subr.mxu0 0.0
    %234 = vmatpush1.msra.mxu0 0.0
    %235 = vmatprep.subr.mxu0 0.0
    %236 = vmatpush1.msra.mxu0 0.0
    %237 = vmatprep.subr.mxu0 0.0
    %238 = vmatpush1.msra.mxu0 0.0
    %239 = vmatprep.subr.mxu0 0.0
    %240 = vmatpush1.msra.mxu0 0.0
    %241 = vmatprep.subr.mxu0 0.0
    %242 = vmatpush1.msra.mxu0 0.0
    %243 = vmatprep.subr.mxu0 0.0
    %244 = vmatpush1.msra.mxu0 0.0
    %245 = vmatprep.subr.mxu0 0.0
    %246 = vmatpush1.msra.mxu0 0.0
    %247 = vmatprep.subr.mxu0 0.0
    %248 = vmatpush1.msra.mxu0 0.0
    %249 = vmatprep.subr.mxu0 0.0
    %250 = vmatpush1.msra.mxu0 0.0
    %251 = vmatprep.subr.mxu0 0.0
    %252 = vmatpush1.msra.mxu0 0.0
    %253 = vmatprep.subr.mxu0 0.0
    %254 = vmatpush1.msra.mxu0 0.0
    %255 = vmatprep.mubr.f32.mxu0 0.0
    %256 = vmatmul.mubr.f32.gmra.mrb[0].mxu0 %v189
    %v257 = vpop.f32.mrb[0].mxu0
    %v258 = vadd.f32 0.0, %v257
    %v259 = vpop.f32.mrb[0].mxu0
    %260 = vdwg.mxu0
    %v262 = vsel %vm41, %v24, 0
    %264 = vmatprep.subr.mxu0 0.0
    %265 = vmatpush1.msra.mxu0 %v37
    %266 = vmatprep.subr.mxu0 0.0
    %267 = vmatpush1.msra.mxu0 %v38
    %268 = vmatprep.subr.mxu0 0.0
    %269 = vmatpush1.msra.mxu0 %v39
    %270 = vmatprep.subr.mxu0 0.0
    %271 = vmatpush1.msra.mxu0 %v40
    %272 = vmatprep.subr.mxu0 0.0
    %273 = vmatpush1.msra.mxu0 0.0
    %274 = vmatprep.subr.mxu0 0.0
    %275 = vmatpush1.msra.mxu0 0.0
    %276 = vmatprep.subr.mxu0 0.0
    %277 = vmatpush1.msra.mxu0 0.0
    %278 = vmatprep.subr.mxu0 0.0
    %279 = vmatpush1.msra.mxu0 0.0
    %280 = vmatprep.subr.mxu0 0.0
    %281 = vmatpush1.msra.mxu0 0.0
    %282 = vmatprep.subr.mxu0 0.0
    %283 = vmatpush1.msra.mxu0 0.0
    %284 = vmatprep.subr.mxu0 0.0
    %285 = vmatpush1.msra.mxu0 0.0
    %286 = vmatprep.subr.mxu0 0.0
    %287 = vmatpush1.msra.mxu0 0.0
    %288 = vmatprep.subr.mxu0 0.0
    %289 = vmatpush1.msra.mxu0 0.0
    %290 = vmatprep.subr.mxu0 0.0
    %291 = vmatpush1.msra.mxu0 0.0
    %292 = vmatprep.subr.mxu0 0.0
    %293 = vmatpush1.msra.mxu0 0.0
    %294 = vmatprep.subr.mxu0 0.0
    %295 = vmatpush1.msra.mxu0 0.0
    %296 = vmatprep.subr.mxu0 0.0
    %297 = vmatpush1.msra.mxu0 0.0
    %298 = vmatprep.subr.mxu0 0.0
    %299 = vmatpush1.msra.mxu0 0.0
    %300 = vmatprep.subr.mxu0 0.0
    %301 = vmatpush1.msra.mxu0 0.0
    %302 = vmatprep.subr.mxu0 0.0
    %303 = vmatpush1.msra.mxu0 0.0
    %304 = vmatprep.subr.mxu0 0.0
    %305 = vmatpush1.msra.mxu0 0.0
    %306 = vmatprep.subr.mxu0 0.0
    %307 = vmatpush1.msra.mxu0 0.0
    %308 = vmatprep.subr.mxu0 0.0
    %309 = vmatpush1.msra.mxu0 0.0
    %310 = vmatprep.subr.mxu0 0.0
    %311 = vmatpush1.msra.mxu0 0.0
    %312 = vmatprep.subr.mxu0 0.0
    %313 = vmatpush1.msra.mxu0 0.0
    %314 = vmatprep.subr.mxu0 0.0
    %315 = vmatpush1.msra.mxu0 0.0
    %316 = vmatprep.subr.mxu0 0.0
    %317 = vmatpush1.msra.mxu0 0.0
    %318 = vmatprep.subr.mxu0 0.0
    %319 = vmatpush1.msra.mxu0 0.0
    %320 = vmatprep.subr.mxu0 0.0
    %321 = vmatpush1.msra.mxu0 0.0
    %322 = vmatprep.subr.mxu0 0.0
    %323 = vmatpush1.msra.mxu0 0.0
    %324 = vmatprep.subr.mxu0 0.0
    %325 = vmatpush1.msra.mxu0 0.0
    %326 = vmatprep.subr.mxu0 0.0
    %327 = vmatpush1.msra.mxu0 0.0
    %328 = vmatprep.mubr.f32.mxu0 0.0
    %329 = vmatmul.mubr.f32.gmra.mrb[0].mxu0 %v262
    %v330 = vpop.f32.mrb[0].mxu0
    %v331 = vadd.f32 0.0, %v330
    %v332 = vpop.f32.mrb[0].mxu0
    %333 = vdwg.mxu0
    %v334 = vld [vmem:[%s3] sm:$0x1]
    %v335 = vld [vmem:[%s3 + $0x1] sm:$0x1]
    %v336 = vld [vmem:[%s3 + $0x2] sm:$0x1]
    %v337 = vld [vmem:[%s3 + $0x3] sm:$0x1]
    %vm338 = vcmp.ne.s32.totalorder %v334, 0
    %vm339 = vcmp.ne.s32.totalorder %v335, 0
    %vm340 = vcmp.ne.s32.totalorder %v336, 0
    %vm341 = vcmp.ne.s32.totalorder %v337, 0
    %v342 = vsel %vm338, 0.0, %v112
    %v343 = vsel %vm339, 0.0, %v185
    %v344 = vsel %vm340, 0.0, %v258
    %v345 = vsel %vm341, 0.0, %v331
    %v346 = vmul.f32 %v342, 0.17677669
    %v347 = vmul.f32 %v343, 0.17677669
    %v348 = vmul.f32 %v344, 0.17677669
    %v349 = vmul.f32 %v345, 0.17677669
    %vm350 = vcmask 57344
    %v351 = vsel %vm350, %v346, -inf
    %352 = vmax.xlane.f32.xlu0 %v351
    %v353 = vpop.xlane.xlu0 %352
    %v354 = vsel %vm350, %v347, -inf
    %355 = vmax.xlane.f32.xlu0 %v354
    %v356 = vpop.xlane.xlu0 %355
    %v357 = vsel %vm350, %v348, -inf
    %358 = vmax.xlane.f32.xlu0 %v357
    %v359 = vpop.xlane.xlu0 %358
    %v360 = vsel %vm350, %v349, -inf
    %361 = vmax.xlane.f32.xlu0 %v360
    %v362 = vpop.xlane.xlu0 %361
    %v363 = vsub.f32 %v346, %v353
    %v364 = vsub.f32 %v347, %v356
    %v365 = vsub.f32 %v348, %v359
    %v366 = vsub.f32 %v349, %v362
    %v367 = vmul.f32 %v363, 1.442695
    %v368 = vpow.pop %v367
    %v369 = vmul.f32 %v364, 1.442695
    %v370 = vpow.pop %v369
    %v371 = vmul.f32 %v365, 1.442695
    %v372 = vpow.pop %v371
    %v373 = vmul.f32 %v366, 1.442695
    %v374 = vpow.pop %v373
    %v375 = vsel %vm350, %v368, 0.0
    %376 = vadd.xlane.f32.xlu0 %v375
    %v377 = vpop.xlane.xlu0 %376
    %v378 = vsel %vm350, %v370, 0.0
    %379 = vadd.xlane.f32.xlu0 %v378
    %v380 = vpop.xlane.xlu0 %379
    %v381 = vsel %vm350, %v372, 0.0
    %382 = vadd.xlane.f32.xlu0 %v381
    %v383 = vpop.xlane.xlu0 %382
    %v384 = vsel %vm350, %v374, 0.0
    %385 = vadd.xlane.f32.xlu0 %v384
    %v386 = vpop.xlane.xlu0 %385
    %v387 = vrcp.pop %v377
    %v388 = vrcp.pop %v380
    %v389 = vrcp.pop %v383
    %v390 = vrcp.pop %v386
    %v391 = vmul.f32 %v368, %v387
    %v392 = vmul.f32 %v370, %v388
    %v393 = vmul.f32 %v372, %v389
    %v394 = vmul.f32 %v374, %v390
    %395 = vst.msk [vmem:[#allocation2] sm:$0x1] %vm350, %v391
    %396 = vst.msk [vmem:[#allocation2 + $0x1] sm:$0x1] %vm350, %v392
    %397 = vst.msk [vmem:[#allocation2 + $0x2] sm:$0x1] %vm350, %v393
    %398 = vst.msk [vmem:[#allocation2 + $0x3] sm:$0x1] %vm350, %v394
    %v399 = vld [vmem:[%s2] sm:$0xff]
    %v400 = vld [vmem:[%s2 + $0x8] sm:$0xff]
    %v401 = vld [vmem:[%s2 + $0x10] sm:$0xff]
    %v402 = vld [vmem:[%s2 + $0x18] sm:$0xff]
    %vm403 = vcmask 64512
    %v405 = vsel %vm403, %v391, 0
    %407 = vmatprep.subr.mxu0 0.0
    %408 = vmatpush1.msra.mxu0 %v399
    %409 = vmatprep.subr.mxu0 0.0
    %410 = vmatpush1.msra.mxu0 0.0
    %411 = vmatprep.subr.mxu0 0.0
    %412 = vmatpush1.msra.mxu0 0.0
    %413 = vmatprep.subr.mxu0 0.0
    %414 = vmatpush1.msra.mxu0 0.0
    %415 = vmatprep.subr.mxu0 0.0
    %416 = vmatpush1.msra.mxu0 0.0
    %417 = vmatprep.subr.mxu0 0.0
    %418 = vmatpush1.msra.mxu0 0.0
    %419 = vmatprep.subr.mxu0 0.0
    %420 = vmatpush1.msra.mxu0 0.0
    %421 = vmatprep.subr.mxu0 0.0
    %422 = vmatpush1.msra.mxu0 0.0
    %423 = vmatprep.subr.mxu0 0.0
    %424 = vmatpush1.msra.mxu0 0.0
    %425 = vmatprep.subr.mxu0 0.0
    %426 = vmatpush1.msra.mxu0 0.0
    %427 = vmatprep.subr.mxu0 0.0
    %428 = vmatpush1.msra.mxu0 0.0
    %429 = vmatprep.subr.mxu0 0.0
    %430 = vmatpush1.msra.mxu0 0.0
    %431 = vmatprep.subr.mxu0 0.0
    %432 = vmatpush1.msra.mxu0 0.0
    %433 = vmatprep.subr.mxu0 0.0
    %434 = vmatpush1.msra.mxu0 0.0
    %435 = vmatprep.subr.mxu0 0.0
    %436 = vmatpush1.msra.mxu0 0.0
    %437 = vmatprep.subr.mxu0 0.0
    %438 = vmatpush1.msra.mxu0 0.0
    %439 = vmatprep.subr.mxu0 0.0
    %440 = vmatpush1.msra.mxu0 0.0
    %441 = vmatprep.subr.mxu0 0.0
    %442 = vmatpush1.msra.mxu0 0.0
    %443 = vmatprep.subr.mxu0 0.0
    %444 = vmatpush1.msra.mxu0 0.0
    %445 = vmatprep.subr.mxu0 0.0
    %446 = vmatpush1.msra.mxu0 0.0
    %447 = vmatprep.subr.mxu0 0.0
    %448 = vmatpush1.msra.mxu0 0.0
    %449 = vmatprep.subr.mxu0 0.0
    %450 = vmatpush1.msra.mxu0 0.0
    %451 = vmatprep.subr.mxu0 0.0
    %452 = vmatpush1.msra.mxu0 0.0
    %453 = vmatprep.subr.mxu0 0.0
    %454 = vmatpush1.msra.mxu0 0.0
    %455 = vmatprep.subr.mxu0 0.0
    %456 = vmatpush1.msra.mxu0 0.0
    %457 = vmatprep.subr.mxu0 0.0
    %458 = vmatpush1.msra.mxu0 0.0
    %459 = vmatprep.subr.mxu0 0.0
    %460 = vmatpush1.msra.mxu0 0.0
    %461 = vmatprep.subr.mxu0 0.0
    %462 = vmatpush1.msra.mxu0 0.0
    %463 = vmatprep.subr.mxu0 0.0
    %464 = vmatpush1.msra.mxu0 0.0
    %465 = vmatprep.subr.mxu0 0.0
    %466 = vmatpush1.msra.mxu0 0.0
    %467 = vmatprep.subr.mxu0 0.0
    %468 = vmatpush1.msra.mxu0 0.0
    %469 = vmatprep.subr.mxu0 0.0
    %470 = vmatpush1.msra.mxu0 0.0
    %471 = vmatprep.mubr.f32.mxu0 0.0
    %472 = vmatmul.mubr.f32.gmra.mrb[0].mxu0 %v405
    %v473 = vpop.f32.mrb[0].mxu0
    %v474 = vadd.f32 0.0, %v473
    %v475 = vpop.f32.mrb[0].mxu0
    %476 = vdwg.mxu0
    %v478 = vsel %vm403, %v392, 0
    %480 = vmatprep.subr.mxu0 0.0
    %481 = vmatpush1.msra.mxu0 %v400
    %482 = vmatprep.subr.mxu0 0.0
    %483 = vmatpush1.msra.mxu0 0.0
    %484 = vmatprep.subr.mxu0 0.0
    %485 = vmatpush1.msra.mxu0 0.0
    %486 = vmatprep.subr.mxu0 0.0
    %487 = vmatpush1.msra.mxu0 0.0
    %488 = vmatprep.subr.mxu0 0.0
    %489 = vmatpush1.msra.mxu0 0.0
    %490 = vmatprep.subr.mxu0 0.0
    %491 = vmatpush1.msra.mxu0 0.0
    %492 = vmatprep.subr.mxu0 0.0
    %493 = vmatpush1.msra.mxu0 0.0
    %494 = vmatprep.subr.mxu0 0.0
    %495 = vmatpush1.msra.mxu0 0.0
    %496 = vmatprep.subr.mxu0 0.0
    %497 = vmatpush1.msra.mxu0 0.0
    %498 = vmatprep.subr.mxu0 0.0
    %499 = vmatpush1.msra.mxu0 0.0
    %500 = vmatprep.subr.mxu0 0.0
    %501 = vmatpush1.msra.mxu0 0.0
    %502 = vmatprep.subr.mxu0 0.0
    %503 = vmatpush1.msra.mxu0 0.0
    %504 = vmatprep.subr.mxu0 0.0
    %505 = vmatpush1.msra.mxu0 0.0
    %506 = vmatprep.subr.mxu0 0.0
    %507 = vmatpush1.msra.mxu0 0.0
    %508 = vmatprep.subr.mxu0 0.0
    %509 = vmatpush1.msra.mxu0 0.0
    %510 = vmatprep.subr.mxu0 0.0
    %511 = vmatpush1.msra.mxu0 0.0
    %512 = vmatprep.subr.mxu0 0.0
    %513 = vmatpush1.msra.mxu0 0.0
    %514 = vmatprep.subr.mxu0 0.0
    %515 = vmatpush1.msra.mxu0 0.0
    %516 = vmatprep.subr.mxu0 0.0
    %517 = vmatpush1.msra.mxu0 0.0
    %518 = vmatprep.subr.mxu0 0.0
    %519 = vmatpush1.msra.mxu0 0.0
    %520 = vmatprep.subr.mxu0 0.0
    %521 = vmatpush1.msra.mxu0 0.0
    %522 = vmatprep.subr.mxu0 0.0
    %523 = vmatpush1.msra.mxu0 0.0
    %524 = vmatprep.subr.mxu0 0.0
    %525 = vmatpush1.msra.mxu0 0.0
    %526 = vmatprep.subr.mxu0 0.0
    %527 = vmatpush1.msra.mxu0 0.0
    %528 = vmatprep.subr.mxu0 0.0
    %529 = vmatpush1.msra.mxu0 0.0
    %530 = vmatprep.subr.mxu0 0.0
    %531 = vmatpush1.msra.mxu0 0.0
    %532 = vmatprep.subr.mxu0 0.0
    %533 = vmatpush1.msra.mxu0 0.0
    %534 = vmatprep.subr.mxu0 0.0
    %535 = vmatpush1.msra.mxu0 0.0
    %536 = vmatprep.subr.mxu0 0.0
    %537 = vmatpush1.msra.mxu0 0.0
    %538 = vmatprep.subr.mxu0 0.0
    %539 = vmatpush1.msra.mxu0 0.0
    %540 = vmatprep.subr.mxu0 0.0
    %541 = vmatpush1.msra.mxu0 0.0
    %542 = vmatprep.subr.mxu0 0.0
    %543 = vmatpush1.msra.mxu0 0.0
    %544 = vmatprep.mubr.f32.mxu0 0.0
    %545 = vmatmul.mubr.f32.gmra.mrb[0].mxu0 %v478
    %v546 = vpop.f32.mrb[0].mxu0
    %v547 = vadd.f32 0.0, %v546
    %v548 = vpop.f32.mrb[0].mxu0
    %549 = vdwg.mxu0
    %v551 = vsel %vm403, %v393, 0
    %553 = vmatprep.subr.mxu0 0.0
    %554 = vmatpush1.msra.mxu0 %v401
    %555 = vmatprep.subr.mxu0 0.0
    %556 = vmatpush1.msra.mxu0 0.0
    %557 = vmatprep.subr.mxu0 0.0
    %558 = vmatpush1.msra.mxu0 0.0
    %559 = vmatprep.subr.mxu0 0.0
    %560 = vmatpush1.msra.mxu0 0.0
    %561 = vmatprep.subr.mxu0 0.0
    %562 = vmatpush1.msra.mxu0 0.0
    %563 = vmatprep.subr.mxu0 0.0
    %564 = vmatpush1.msra.mxu0 0.0
    %565 = vmatprep.subr.mxu0 0.0
    %566 = vmatpush1.msra.mxu0 0.0
    %567 = vmatprep.subr.mxu0 0.0
    %568 = vmatpush1.msra.mxu0 0.0
    %569 = vmatprep.subr.mxu0 0.0
    %570 = vmatpush1.msra.mxu0 0.0
    %571 = vmatprep.subr.mxu0 0.0
    %572 = vmatpush1.msra.mxu0 0.0
    %573 = vmatprep.subr.mxu0 0.0
    %574 = vmatpush1.msra.mxu0 0.0
    %575 = vmatprep.subr.mxu0 0.0
    %576 = vmatpush1.msra.mxu0 0.0
    %577 = vmatprep.subr.mxu0 0.0
    %578 = vmatpush1.msra.mxu0 0.0
    %579 = vmatprep.subr.mxu0 0.0
    %580 = vmatpush1.msra.mxu0 0.0
    %581 = vmatprep.subr.mxu0 0.0
    %582 = vmatpush1.msra.mxu0 0.0
    %583 = vmatprep.subr.mxu0 0.0
    %584 = vmatpush1.msra.mxu0 0.0
    %585 = vmatprep.subr.mxu0 0.0
    %586 = vmatpush1.msra.mxu0 0.0
    %587 = vmatprep.subr.mxu0 0.0
    %588 = vmatpush1.msra.mxu0 0.0
    %589 = vmatprep.subr.mxu0 0.0
    %590 = vmatpush1.msra.mxu0 0.0
    %591 = vmatprep.subr.mxu0 0.0
    %592 = vmatpush1.msra.mxu0 0.0
    %593 = vmatprep.subr.mxu0 0.0
    %594 = vmatpush1.msra.mxu0 0.0
    %595 = vmatprep.subr.mxu0 0.0
    %596 = vmatpush1.msra.mxu0 0.0
    %597 = vmatprep.subr.mxu0 0.0
    %598 = vmatpush1.msra.mxu0 0.0
    %599 = vmatprep.subr.mxu0 0.0
    %600 = vmatpush1.msra.mxu0 0.0
    %601 = vmatprep.subr.mxu0 0.0
    %602 = vmatpush1.msra.mxu0 0.0
    %603 = vmatprep.subr.mxu0 0.0
    %604 = vmatpush1.msra.mxu0 0.0
    %605 = vmatprep.subr.mxu0 0.0
    %606 = vmatpush1.msra.mxu0 0.0
    %607 = vmatprep.subr.mxu0 0.0
    %608 = vmatpush1.msra.mxu0 0.0
    %609 = vmatprep.subr.mxu0 0.0
    %610 = vmatpush1.msra.mxu0 0.0
    %611 = vmatprep.subr.mxu0 0.0
    %612 = vmatpush1.msra.mxu0 0.0
    %613 = vmatprep.subr.mxu0 0.0
    %614 = vmatpush1.msra.mxu0 0.0
    %615 = vmatprep.subr.mxu0 0.0
    %616 = vmatpush1.msra.mxu0 0.0
    %617 = vmatprep.mubr.f32.mxu0 0.0
    %618 = vmatmul.mubr.f32.gmra.mrb[0].mxu0 %v551
    %v619 = vpop.f32.mrb[0].mxu0
    %v620 = vadd.f32 0.0, %v619
    %v621 = vpop.f32.mrb[0].mxu0
    %622 = vdwg.mxu0
    %v624 = vsel %vm403, %v394, 0
    %626 = vmatprep.subr.mxu0 0.0
    %627 = vmatpush1.msra.mxu0 %v402
    %628 = vmatprep.subr.mxu0 0.0
    %629 = vmatpush1.msra.mxu0 0.0
    %630 = vmatprep.subr.mxu0 0.0
    %631 = vmatpush1.msra.mxu0 0.0
    %632 = vmatprep.subr.mxu0 0.0
    %633 = vmatpush1.msra.mxu0 0.0
    %634 = vmatprep.subr.mxu0 0.0
    %635 = vmatpush1.msra.mxu0 0.0
    %636 = vmatprep.subr.mxu0 0.0
    %637 = vmatpush1.msra.mxu0 0.0
    %638 = vmatprep.subr.mxu0 0.0
    %639 = vmatpush1.msra.mxu0 0.0
    %640 = vmatprep.subr.mxu0 0.0
    %641 = vmatpush1.msra.mxu0 0.0
    %642 = vmatprep.subr.mxu0 0.0
    %643 = vmatpush1.msra.mxu0 0.0
    %644 = vmatprep.subr.mxu0 0.0
    %645 = vmatpush1.msra.mxu0 0.0
    %646 = vmatprep.subr.mxu0 0.0
    %647 = vmatpush1.msra.mxu0 0.0
    %648 = vmatprep.subr.mxu0 0.0
    %649 = vmatpush1.msra.mxu0 0.0
    %650 = vmatprep.subr.mxu0 0.0
    %651 = vmatpush1.msra.mxu0 0.0
    %652 = vmatprep.subr.mxu0 0.0
    %653 = vmatpush1.msra.mxu0 0.0
    %654 = vmatprep.subr.mxu0 0.0
    %655 = vmatpush1.msra.mxu0 0.0
    %656 = vmatprep.subr.mxu0 0.0
    %657 = vmatpush1.msra.mxu0 0.0
    %658 = vmatprep.subr.mxu0 0.0
    %659 = vmatpush1.msra.mxu0 0.0
    %660 = vmatprep.subr.mxu0 0.0
    %661 = vmatpush1.msra.mxu0 0.0
    %662 = vmatprep.subr.mxu0 0.0
    %663 = vmatpush1.msra.mxu0 0.0
    %664 = vmatprep.subr.mxu0 0.0
    %665 = vmatpush1.msra.mxu0 0.0
    %666 = vmatprep.subr.mxu0 0.0
    %667 = vmatpush1.msra.mxu0 0.0
    %668 = vmatprep.subr.mxu0 0.0
    %669 = vmatpush1.msra.mxu0 0.0
    %670 = vmatprep.subr.mxu0 0.0
    %671 = vmatpush1.msra.mxu0 0.0
    %672 = vmatprep.subr.mxu0 0.0
    %673 = vmatpush1.msra.mxu0 0.0
    %674 = vmatprep.subr.mxu0 0.0
    %675 = vmatpush1.msra.mxu0 0.0
    %676 = vmatprep.subr.mxu0 0.0
    %677 = vmatpush1.msra.mxu0 0.0
    %678 = vmatprep.subr.mxu0 0.0
    %679 = vmatpush1.msra.mxu0 0.0
    %680 = vmatprep.subr.mxu0 0.0
    %681 = vmatpush1.msra.mxu0 0.0
    %682 = vmatprep.subr.mxu0 0.0
    %683 = vmatpush1.msra.mxu0 0.0
    %684 = vmatprep.subr.mxu0 0.0
    %685 = vmatpush1.msra.mxu0 0.0
    %686 = vmatprep.subr.mxu0 0.0
    %687 = vmatpush1.msra.mxu0 0.0
    %688 = vmatprep.subr.mxu0 0.0
    %689 = vmatpush1.msra.mxu0 0.0
    %690 = vmatprep.mubr.f32.mxu0 0.0
    %691 = vmatmul.mubr.f32.gmra.mrb[0].mxu0 %v624
    %v692 = vpop.f32.mrb[0].mxu0
    %v693 = vadd.f32 0.0, %v692
    %v694 = vpop.f32.mrb[0].mxu0
    %695 = vdwg.mxu0
    %vm696 = vcmask 253952
    %697 = vst.msk [vmem:[#allocation4] sm:$0x1] %vm696, %v474
    %698 = vst.msk [vmem:[#allocation4 + $0x1] sm:$0x1] %vm696, %v547
    %699 = vst.msk [vmem:[#allocation4 + $0x2] sm:$0x1] %vm696, %v620
    %700 = vst.msk [vmem:[#allocation4 + $0x3] sm:$0x1] %vm696, %v693
    // Predicated region
    $region18: #{tpu_custom_call.1} parent=1 // pred_check
      _
    $region19: #{tpu_custom_call.1} parent=1 // pred_check_branch
      %702 = sbr.rel (0) target = $region21
    $region20: #{tpu_custom_call.1} parent=1 // pred_region
      %s704 = ssub.s32 64, 64
      %705 = vsyncadd [#allocation3], %s704
      %s706 = sshll.u32 [#allocation2], 4
      %s707 = int_to_ptr.vmem [resolvable:$true] %s706
      %712 = dma.vmem_to_hbm [thread:$0]  %s707, 64, %s4, [#allocation3], 16, 16, 1
    $region21: #{tpu_custom_call.1} parent=1 // pred_fallthru
      _
    // Predicated region
    $region22: #{tpu_custom_call.1} parent=1 // pred_check
      _
    $region23: #{tpu_custom_call.1} parent=1 // pred_check_branch
      %714 = sbr.rel (0) target = $region25
    $region24: #{tpu_custom_call.1} parent=1 // pred_region
      %s716 = ssub.s32 64, 64
      %717 = vsyncadd [#allocation5], %s716
      %s718 = sshll.u32 [#allocation4], 4
      %s719 = int_to_ptr.vmem [resolvable:$true] %s718
      %724 = dma.vmem_to_hbm [thread:$0]  %s719, 64, %s5, [#allocation5], 16, 16, 1
    $region25: #{tpu_custom_call.1} parent=1 // pred_fallthru
      _
    // Predicated region
    $region26: #{tpu_custom_call.1} parent=1 // pred_check
      _
    $region27: #{tpu_custom_call.1} parent=1 // pred_check_branch
      %726 = sbr.rel (0) target = $region29
    $region28: #{tpu_custom_call.1} parent=1 // pred_region
      %727 = dma.done [#allocation3], 64
    $region29: #{tpu_custom_call.1} parent=1 // pred_fallthru
      _
    // Predicated region
    $region30: #{tpu_custom_call.1} parent=1 // pred_check
      _
    $region31: #{tpu_custom_call.1} parent=1 // pred_check_branch
      %729 = sbr.rel (0) target = $region33
    $region32: #{tpu_custom_call.1} parent=1 // pred_region
      %730 = dma.done [#allocation5], 64
    $region33: #{tpu_custom_call.1} parent=1 // pred_fallthru
      _
    %731 = vsyncpa [#allocation3], 1
    %732 = vsyncpa [#allocation5], 1

</llo_original>
